<compile_context>
chip_gen: v7x
topology: tpu7x:2x2x1
jax: 0.10.0
libtpu: 0.0.40
codegen_flags: <defaults>
</compile_context>

<pallas_src>
import math
import jax
import jax.numpy as jnp
from jax.experimental import pallas as pl
from jax.experimental.pallas import tpu as pltpu  # noqa: F401  (TPU backend)

# ---- model dims (small, consistent with an FSMT encoder layer) ----
BATCH = 2
SEQ = 8
EMBED = 32
NUM_HEADS = 4
HEAD_DIM = EMBED // NUM_HEADS
FFN = 64
EPS = 1e-5
PACK_W = max(3 * EMBED, FFN)  # width of the packed bias/LN-param slab (= 96)


def _layernorm(x, w, b, eps):
    mu = jnp.mean(x, axis=-1, keepdims=True)
    xc = x - mu
    var = jnp.mean(xc * xc, axis=-1, keepdims=True)
    inv = jax.lax.rsqrt(var + eps)
    return xc * inv * w + b


def encoder_layer_kernel(x_ref, mask_ref, wqkv_ref, wo_ref, w1_ref, w2_ref,
                         bias_ref, out_ref):
    x = x_ref[...]            # (B*S, D)
    add_mask = mask_ref[...]  # (B, 1, S) additive mask (0 or -1e9)
    bias = bias_ref[...]      # (8, PACK_W) packed biases / LN params

    bqkv = bias[0:1, 0:3 * EMBED]      # (1, 3D)
    b1   = bias[1:2, 0:FFN]            # (1, FFN)
    bo   = bias[2:3, 0:EMBED]          # (1, D)
    b2   = bias[3:4, 0:EMBED]
    n1w  = bias[4:5, 0:EMBED]
    n1b  = bias[5:6, 0:EMBED]
    n2w  = bias[6:7, 0:EMBED]
    n2b  = bias[7:8, 0:EMBED]

    # Fused QKV projection: one MXU matmul for the whole batch.
    qkv = jnp.dot(x, wqkv_ref[...], preferred_element_type=jnp.float32) + bqkv  # (B*S, 3D)
    scale = 1.0 / math.sqrt(HEAD_DIM)
    q = qkv[:, 0:EMBED] * scale
    k = qkv[:, EMBED:2 * EMBED]
    v = qkv[:, 2 * EMBED:3 * EMBED]

    wo = wo_ref[...]  # (D, D), already transposed on the host

    # Per-head attention, batched over the batch dim.  The head's contribution
    # to the output projection is accumulated directly, avoiding concatenation.
    attn = jnp.zeros((BATCH * SEQ, EMBED), jnp.float32)
    for h in range(NUM_HEADS):
        sl = slice(h * HEAD_DIM, (h + 1) * HEAD_DIM)
        qh = q[:, sl].reshape(BATCH, SEQ, HEAD_DIM)   # leading-dim split: layout-trivial
        kh = k[:, sl].reshape(BATCH, SEQ, HEAD_DIM)
        vh = v[:, sl].reshape(BATCH, SEQ, HEAD_DIM)
        s = jnp.einsum('bqd,bkd->bqk', qh, kh,
                       preferred_element_type=jnp.float32)          # (B, S, S)
        s = s + add_mask                                            # key-padding mask
        s = s - jnp.max(s, axis=-1, keepdims=True)
        p = jnp.exp(s)
        p = p * pl.reciprocal(jnp.sum(p, axis=-1, keepdims=True), approx=True)
        ctx = jnp.einsum('bqk,bkd->bqd', p, vh,
                         preferred_element_type=jnp.float32)        # (B, S, hd)
        attn = attn + jnp.dot(ctx.reshape(BATCH * SEQ, HEAD_DIM), wo[sl, :],
                              preferred_element_type=jnp.float32)
    attn = attn + bo

    # Residual + LayerNorm 1 (post-norm).
    h1 = _layernorm(x + attn, n1w, n1b, EPS)

    # Feed-forward with ReLU (FSMT act_fn='relu' -> use_gelu=False).
    ff = jnp.dot(h1, w1_ref[...], preferred_element_type=jnp.float32) + b1
    ff = jnp.maximum(ff, 0.0)
    ff = jnp.dot(ff, w2_ref[...], preferred_element_type=jnp.float32) + b2

    # Residual + LayerNorm 2.
    out_ref[...] = _layernorm(h1 + ff, n2w, n2b, EPS)


def fsmt_encoder_layer_bt(hidden_states, attention_mask, params):
    """hidden_states: (B, S, D) f32; attention_mask: (B, S) bool, True = pad."""
    B, S, D = hidden_states.shape
    (wq, wk, wv, bq, bk, bv, wo, bo, w1, b1, w2, b2, n1w, n1b, n2w, n2b) = params

    x2d = hidden_states.reshape(B * S, D).astype(jnp.float32)
    add_mask = jnp.where(attention_mask, -1e9, 0.0).astype(jnp.float32).reshape(B, 1, S)

    # Host-side weight fusion / transposition (free in XLA, outside the kernel).
    wqkv_t = jnp.concatenate([wq, wk, wv], axis=0).T   # (D, 3D)
    wo_t = wo.T                                        # (D, D)
    w1_t = w1.T                                        # (D, FFN)
    w2_t = w2.T                                        # (FFN, D)

    def pad_row(v):
        return jnp.pad(v, (0, PACK_W - v.shape[0]))

    bias_slab = jnp.stack([
        jnp.concatenate([bq, bk, bv]),                 # row 0: fused qkv bias (96)
        pad_row(b1),                                   # row 1: fc1 bias
        pad_row(bo),                                   # row 2: out-proj bias
        pad_row(b2),                                   # row 3: fc2 bias
        pad_row(n1w), pad_row(n1b),                    # rows 4-5: LN1
        pad_row(n2w), pad_row(n2b),                    # rows 6-7: LN2
    ]).astype(jnp.float32)                             # (8, PACK_W)

    out2d = pl.pallas_call(
        encoder_layer_kernel,
        out_shape=jax.ShapeDtypeStruct((B * S, D), jnp.float32),
    )(x2d, add_mask, wqkv_t, wo_t, w1_t, w2_t, bias_slab)
    return out2d.reshape(B, S, D)


def reference(hidden_states, attention_mask, params):
    (wq, wk, wv, bq, bk, bv, wo, bo, w1, b1, w2, b2, n1w, n1b, n2w, n2b) = params
    x = hidden_states
    B, S, D = x.shape
    q = x @ wq.T + bq
    k = x @ wk.T + bk
    v = x @ wv.T + bv
    q = q.reshape(B, S, NUM_HEADS, HEAD_DIM).transpose(0, 2, 1, 3)
    k = k.reshape(B, S, NUM_HEADS, HEAD_DIM).transpose(0, 2, 1, 3)
    v = v.reshape(B, S, NUM_HEADS, HEAD_DIM).transpose(0, 2, 1, 3)
    s = jnp.einsum("bhqd,bhkd->bhqk", q, k) / math.sqrt(HEAD_DIM)
    s = s + jnp.where(attention_mask, -1e9, 0.0)[:, None, None, :]
    p = jax.nn.softmax(s, axis=-1)
    ctx = jnp.einsum("bhqk,bhkd->bhqd", p, v).transpose(0, 2, 1, 3).reshape(B, S, D)
    attn = ctx @ wo.T + bo
    h1 = _layernorm(x + attn, n1w, n1b, EPS)
    ff = jnp.maximum(h1 @ w1.T + b1, 0.0) @ w2.T + b2
    return _layernorm(h1 + ff, n2w, n2b, EPS)


def make_params(key):
    ks = jax.random.split(key, 12)
    init = lambda k, shape, scale=0.1: (scale * jax.random.normal(k, shape)).astype(jnp.float32)
    wq = init(ks[0], (EMBED, EMBED)); bq = init(ks[1], (EMBED,))
    wk = init(ks[2], (EMBED, EMBED)); bk = init(ks[3], (EMBED,))
    wv = init(ks[4], (EMBED, EMBED)); bv = init(ks[5], (EMBED,))
    wo = init(ks[6], (EMBED, EMBED)); bo = init(ks[7], (EMBED,))
    w1 = init(ks[8], (FFN, EMBED));   b1 = init(ks[9], (FFN,))
    w2 = init(ks[10], (EMBED, FFN));  b2 = init(ks[11], (EMBED,))
    n1w = jnp.ones((EMBED,), jnp.float32); n1b = jnp.zeros((EMBED,), jnp.float32)
    n2w = jnp.ones((EMBED,), jnp.float32); n2b = jnp.zeros((EMBED,), jnp.float32)
    return (wq, wk, wv, bq, bk, bv, wo, bo, w1, b1, w2, b2, n1w, n1b, n2w, n2b)


if __name__ == "__main__":
    key = jax.random.PRNGKey(0)
    k_x, k_p = jax.random.split(key)
    hidden_states = jax.random.normal(k_x, (BATCH, SEQ, EMBED), dtype=jnp.float32)
    # key-padding mask: last 2 positions of batch element 1 are padded
    attention_mask = jnp.zeros((BATCH, SEQ), dtype=bool).at[1, -2:].set(True)
    params = make_params(k_p)

    out = fsmt_encoder_layer_bt(hidden_states, attention_mask, params)
    out = jax.block_until_ready(out)

    ref = reference(hidden_states, attention_mask, params)
    assert out.shape == (BATCH, SEQ, EMBED)
    # Tolerance loosened slightly vs pure-f32 because the softmax denominator
    # uses the EUP approximate reciprocal (pl.reciprocal(approx=True)).
    assert jnp.allclose(out, ref, atol=1e-2, rtol=1e-2), "kernel mismatch vs reference"
    print("KERNEL_OK")
</pallas_src>

<mosaic_0001>
module attributes {stable_mosaic.version = 11 : i64} {
  func.func @encoder_layer_kernel(%arg0: memref<16x32xf32, #tpu.memory_space<vmem>>, %arg1: memref<2x1x8xf32, #tpu.memory_space<vmem>>, %arg2: memref<32x96xf32, #tpu.memory_space<vmem>>, %arg3: memref<32x32xf32, #tpu.memory_space<vmem>>, %arg4: memref<32x64xf32, #tpu.memory_space<vmem>>, %arg5: memref<64x32xf32, #tpu.memory_space<vmem>>, %arg6: memref<8x96xf32, #tpu.memory_space<vmem>>, %arg7: memref<16x32xf32, #tpu.memory_space<vmem>>) attributes {dimension_semantics = [], scalar_prefetch = 0 : i64, scratch_operands = 0 : i64, tpu.core_type = #tpu.core_type<tc>} {
    %c0 = arith.constant 0 : index
    %c0_0 = arith.constant 0 : index
    %0 = vector.load %arg0[%c0, %c0_0] : memref<16x32xf32, #tpu.memory_space<vmem>>, vector<16x32xf32>
    %c0_1 = arith.constant 0 : index
    %c0_2 = arith.constant 0 : index
    %c0_3 = arith.constant 0 : index
    %1 = vector.load %arg1[%c0_1, %c0_2, %c0_3] : memref<2x1x8xf32, #tpu.memory_space<vmem>>, vector<2x1x8xf32>
    %c0_4 = arith.constant 0 : index
    %c0_5 = arith.constant 0 : index
    %2 = vector.load %arg6[%c0_4, %c0_5] : memref<8x96xf32, #tpu.memory_space<vmem>>, vector<8x96xf32>
    %3 = vector.extract_strided_slice %2 {offsets = [0, 0], sizes = [1, 96], strides = [1, 1]} : vector<8x96xf32> to vector<1x96xf32>
    %4 = vector.extract_strided_slice %2 {offsets = [1, 0], sizes = [1, 64], strides = [1, 1]} : vector<8x96xf32> to vector<1x64xf32>
    %5 = vector.extract_strided_slice %2 {offsets = [2, 0], sizes = [1, 32], strides = [1, 1]} : vector<8x96xf32> to vector<1x32xf32>
    %6 = vector.extract_strided_slice %2 {offsets = [3, 0], sizes = [1, 32], strides = [1, 1]} : vector<8x96xf32> to vector<1x32xf32>
    %7 = vector.extract_strided_slice %2 {offsets = [4, 0], sizes = [1, 32], strides = [1, 1]} : vector<8x96xf32> to vector<1x32xf32>
    %8 = vector.extract_strided_slice %2 {offsets = [5, 0], sizes = [1, 32], strides = [1, 1]} : vector<8x96xf32> to vector<1x32xf32>
    %9 = vector.extract_strided_slice %2 {offsets = [6, 0], sizes = [1, 32], strides = [1, 1]} : vector<8x96xf32> to vector<1x32xf32>
    %10 = vector.extract_strided_slice %2 {offsets = [7, 0], sizes = [1, 32], strides = [1, 1]} : vector<8x96xf32> to vector<1x32xf32>
    %c0_6 = arith.constant 0 : index
    %c0_7 = arith.constant 0 : index
    %11 = vector.load %arg2[%c0_6, %c0_7] : memref<32x96xf32, #tpu.memory_space<vmem>>, vector<32x96xf32>
    %cst = arith.constant dense<0.000000e+00> : vector<16x96xf32>
    %12 = tpu.matmul %0, %11, %cst {dimension_numbers = #tpu.dot_dimension_numbers<[1], [0], [0], [1], [0, 0, 1, 1], [], []>} : vector<16x32xf32>, vector<32x96xf32>, vector<16x96xf32> -> vector<16x96xf32>
    %13 = vector.broadcast %3 : vector<1x96xf32> to vector<16x96xf32>
    %14 = arith.addf %12, %13 : vector<16x96xf32>
    %15 = vector.extract_strided_slice %14 {offsets = [0, 0], sizes = [16, 32], strides = [1, 1]} : vector<16x96xf32> to vector<16x32xf32>
    %cst_8 = arith.constant 0.353553385 : f32
    %16 = vector.broadcast %cst_8 : f32 to vector<16x32xf32>
    %17 = arith.mulf %15, %16 : vector<16x32xf32>
    %18 = vector.extract_strided_slice %14 {offsets = [0, 32], sizes = [16, 32], strides = [1, 1]} : vector<16x96xf32> to vector<16x32xf32>
    %19 = vector.extract_strided_slice %14 {offsets = [0, 64], sizes = [16, 32], strides = [1, 1]} : vector<16x96xf32> to vector<16x32xf32>
    %c0_9 = arith.constant 0 : index
    %c0_10 = arith.constant 0 : index
    %20 = vector.load %arg3[%c0_9, %c0_10] : memref<32x32xf32, #tpu.memory_space<vmem>>, vector<32x32xf32>
    %cst_11 = arith.constant 0.000000e+00 : f32
    %21 = vector.broadcast %cst_11 : f32 to vector<16x32xf32>
    %22 = vector.extract_strided_slice %17 {offsets = [0, 0], sizes = [16, 8], strides = [1, 1]} : vector<16x32xf32> to vector<16x8xf32>
    %23 = vector.shape_cast %22 : vector<16x8xf32> to vector<2x8x8xf32>
    %24 = vector.extract_strided_slice %18 {offsets = [0, 0], sizes = [16, 8], strides = [1, 1]} : vector<16x32xf32> to vector<16x8xf32>
    %25 = vector.shape_cast %24 : vector<16x8xf32> to vector<2x8x8xf32>
    %26 = vector.extract_strided_slice %19 {offsets = [0, 0], sizes = [16, 8], strides = [1, 1]} : vector<16x32xf32> to vector<16x8xf32>
    %27 = vector.shape_cast %26 : vector<16x8xf32> to vector<2x8x8xf32>
    "tpu.trace_start"() <{level = 10 : i32, message = "bqd,bkd->bqk"}> : () -> ()
    %cst_12 = arith.constant dense<0.000000e+00> : vector<2x8x8xf32>
    %28 = tpu.matmul %23, %25, %cst_12 {dimension_numbers = #tpu.dot_dimension_numbers<[2], [2], [1], [1], [0, 0, 0, 1, 1, 1], [0], [0]>} : vector<2x8x8xf32>, vector<2x8x8xf32>, vector<2x8x8xf32> -> vector<2x8x8xf32>
    "tpu.trace_stop"() : () -> ()
    %29 = vector.broadcast %1 : vector<2x1x8xf32> to vector<2x8x8xf32>
    %30 = arith.addf %28, %29 : vector<2x8x8xf32>
    %cst_13 = arith.constant dense<0xFF800000> : vector<2x8xf32>
    %31 = vector.multi_reduction <maximumf>, %30, %cst_13 [2] : vector<2x8x8xf32> to vector<2x8xf32>
    %32 = vector.shape_cast %31 : vector<2x8xf32> to vector<2x8x1xf32>
    %33 = vector.broadcast %32 : vector<2x8x1xf32> to vector<2x8x8xf32>
    %34 = arith.subf %30, %33 : vector<2x8x8xf32>
    %35 = math.exp %34 : vector<2x8x8xf32>
    %cst_14 = arith.constant dense<0.000000e+00> : vector<2x8xf32>
    %36 = vector.multi_reduction <add>, %35, %cst_14 [2] : vector<2x8x8xf32> to vector<2x8xf32>
    %37 = vector.shape_cast %36 : vector<2x8xf32> to vector<2x8x1xf32>
    %38 = tpu.reciprocal %37 {approx = true} : vector<2x8x1xf32> -> vector<2x8x1xf32>
    %39 = vector.broadcast %38 : vector<2x8x1xf32> to vector<2x8x8xf32>
    %40 = arith.mulf %35, %39 : vector<2x8x8xf32>
    "tpu.trace_start"() <{level = 10 : i32, message = "bqk,bkd->bqd"}> : () -> ()
    %cst_15 = arith.constant dense<0.000000e+00> : vector<2x8x8xf32>
    %41 = tpu.matmul %40, %27, %cst_15 {dimension_numbers = #tpu.dot_dimension_numbers<[2], [1], [1], [2], [0, 0, 0, 1, 1, 2], [0], [0]>} : vector<2x8x8xf32>, vector<2x8x8xf32>, vector<2x8x8xf32> -> vector<2x8x8xf32>
    "tpu.trace_stop"() : () -> ()
    %42 = vector.shape_cast %41 : vector<2x8x8xf32> to vector<16x8xf32>
    %43 = vector.extract_strided_slice %20 {offsets = [0, 0], sizes = [8, 32], strides = [1, 1]} : vector<32x32xf32> to vector<8x32xf32>
    %cst_16 = arith.constant dense<0.000000e+00> : vector<16x32xf32>
    %44 = tpu.matmul %42, %43, %cst_16 {dimension_numbers = #tpu.dot_dimension_numbers<[1], [0], [0], [1], [0, 0, 1, 1], [], []>} : vector<16x8xf32>, vector<8x32xf32>, vector<16x32xf32> -> vector<16x32xf32>
    %45 = arith.addf %21, %44 : vector<16x32xf32>
    %46 = vector.extract_strided_slice %17 {offsets = [0, 8], sizes = [16, 8], strides = [1, 1]} : vector<16x32xf32> to vector<16x8xf32>
    %47 = vector.shape_cast %46 : vector<16x8xf32> to vector<2x8x8xf32>
    %48 = vector.extract_strided_slice %18 {offsets = [0, 8], sizes = [16, 8], strides = [1, 1]} : vector<16x32xf32> to vector<16x8xf32>
    %49 = vector.shape_cast %48 : vector<16x8xf32> to vector<2x8x8xf32>
    %50 = vector.extract_strided_slice %19 {offsets = [0, 8], sizes = [16, 8], strides = [1, 1]} : vector<16x32xf32> to vector<16x8xf32>
    %51 = vector.shape_cast %50 : vector<16x8xf32> to vector<2x8x8xf32>
    "tpu.trace_start"() <{level = 10 : i32, message = "bqd,bkd->bqk"}> : () -> ()
    %cst_17 = arith.constant dense<0.000000e+00> : vector<2x8x8xf32>
    %52 = tpu.matmul %47, %49, %cst_17 {dimension_numbers = #tpu.dot_dimension_numbers<[2], [2], [1], [1], [0, 0, 0, 1, 1, 1], [0], [0]>} : vector<2x8x8xf32>, vector<2x8x8xf32>, vector<2x8x8xf32> -> vector<2x8x8xf32>
    "tpu.trace_stop"() : () -> ()
    %53 = vector.broadcast %1 : vector<2x1x8xf32> to vector<2x8x8xf32>
    %54 = arith.addf %52, %53 : vector<2x8x8xf32>
    %cst_18 = arith.constant dense<0xFF800000> : vector<2x8xf32>
    %55 = vector.multi_reduction <maximumf>, %54, %cst_18 [2] : vector<2x8x8xf32> to vector<2x8xf32>
    %56 = vector.shape_cast %55 : vector<2x8xf32> to vector<2x8x1xf32>
    %57 = vector.broadcast %56 : vector<2x8x1xf32> to vector<2x8x8xf32>
    %58 = arith.subf %54, %57 : vector<2x8x8xf32>
    %59 = math.exp %58 : vector<2x8x8xf32>
    %cst_19 = arith.constant dense<0.000000e+00> : vector<2x8xf32>
    %60 = vector.multi_reduction <add>, %59, %cst_19 [2] : vector<2x8x8xf32> to vector<2x8xf32>
    %61 = vector.shape_cast %60 : vector<2x8xf32> to vector<2x8x1xf32>
    %62 = tpu.reciprocal %61 {approx = true} : vector<2x8x1xf32> -> vector<2x8x1xf32>
    %63 = vector.broadcast %62 : vector<2x8x1xf32> to vector<2x8x8xf32>
    %64 = arith.mulf %59, %63 : vector<2x8x8xf32>
    "tpu.trace_start"() <{level = 10 : i32, message = "bqk,bkd->bqd"}> : () -> ()
    %cst_20 = arith.constant dense<0.000000e+00> : vector<2x8x8xf32>
    %65 = tpu.matmul %64, %51, %cst_20 {dimension_numbers = #tpu.dot_dimension_numbers<[2], [1], [1], [2], [0, 0, 0, 1, 1, 2], [0], [0]>} : vector<2x8x8xf32>, vector<2x8x8xf32>, vector<2x8x8xf32> -> vector<2x8x8xf32>
    "tpu.trace_stop"() : () -> ()
    %66 = vector.shape_cast %65 : vector<2x8x8xf32> to vector<16x8xf32>
    %67 = vector.extract_strided_slice %20 {offsets = [8, 0], sizes = [8, 32], strides = [1, 1]} : vector<32x32xf32> to vector<8x32xf32>
    %cst_21 = arith.constant dense<0.000000e+00> : vector<16x32xf32>
    %68 = tpu.matmul %66, %67, %cst_21 {dimension_numbers = #tpu.dot_dimension_numbers<[1], [0], [0], [1], [0, 0, 1, 1], [], []>} : vector<16x8xf32>, vector<8x32xf32>, vector<16x32xf32> -> vector<16x32xf32>
    %69 = arith.addf %45, %68 : vector<16x32xf32>
    %70 = vector.extract_strided_slice %17 {offsets = [0, 16], sizes = [16, 8], strides = [1, 1]} : vector<16x32xf32> to vector<16x8xf32>
    %71 = vector.shape_cast %70 : vector<16x8xf32> to vector<2x8x8xf32>
    %72 = vector.extract_strided_slice %18 {offsets = [0, 16], sizes = [16, 8], strides = [1, 1]} : vector<16x32xf32> to vector<16x8xf32>
    %73 = vector.shape_cast %72 : vector<16x8xf32> to vector<2x8x8xf32>
    %74 = vector.extract_strided_slice %19 {offsets = [0, 16], sizes = [16, 8], strides = [1, 1]} : vector<16x32xf32> to vector<16x8xf32>
    %75 = vector.shape_cast %74 : vector<16x8xf32> to vector<2x8x8xf32>
    "tpu.trace_start"() <{level = 10 : i32, message = "bqd,bkd->bqk"}> : () -> ()
    %cst_22 = arith.constant dense<0.000000e+00> : vector<2x8x8xf32>
    %76 = tpu.matmul %71, %73, %cst_22 {dimension_numbers = #tpu.dot_dimension_numbers<[2], [2], [1], [1], [0, 0, 0, 1, 1, 1], [0], [0]>} : vector<2x8x8xf32>, vector<2x8x8xf32>, vector<2x8x8xf32> -> vector<2x8x8xf32>
    "tpu.trace_stop"() : () -> ()
    %77 = vector.broadcast %1 : vector<2x1x8xf32> to vector<2x8x8xf32>
    %78 = arith.addf %76, %77 : vector<2x8x8xf32>
    %cst_23 = arith.constant dense<0xFF800000> : vector<2x8xf32>
    %79 = vector.multi_reduction <maximumf>, %78, %cst_23 [2] : vector<2x8x8xf32> to vector<2x8xf32>
    %80 = vector.shape_cast %79 : vector<2x8xf32> to vector<2x8x1xf32>
    %81 = vector.broadcast %80 : vector<2x8x1xf32> to vector<2x8x8xf32>
    %82 = arith.subf %78, %81 : vector<2x8x8xf32>
    %83 = math.exp %82 : vector<2x8x8xf32>
    %cst_24 = arith.constant dense<0.000000e+00> : vector<2x8xf32>
    %84 = vector.multi_reduction <add>, %83, %cst_24 [2] : vector<2x8x8xf32> to vector<2x8xf32>
    %85 = vector.shape_cast %84 : vector<2x8xf32> to vector<2x8x1xf32>
    %86 = tpu.reciprocal %85 {approx = true} : vector<2x8x1xf32> -> vector<2x8x1xf32>
    %87 = vector.broadcast %86 : vector<2x8x1xf32> to vector<2x8x8xf32>
    %88 = arith.mulf %83, %87 : vector<2x8x8xf32>
    "tpu.trace_start"() <{level = 10 : i32, message = "bqk,bkd->bqd"}> : () -> ()
    %cst_25 = arith.constant dense<0.000000e+00> : vector<2x8x8xf32>
    %89 = tpu.matmul %88, %75, %cst_25 {dimension_numbers = #tpu.dot_dimension_numbers<[2], [1], [1], [2], [0, 0, 0, 1, 1, 2], [0], [0]>} : vector<2x8x8xf32>, vector<2x8x8xf32>, vector<2x8x8xf32> -> vector<2x8x8xf32>
    "tpu.trace_stop"() : () -> ()
    %90 = vector.shape_cast %89 : vector<2x8x8xf32> to vector<16x8xf32>
    %91 = vector.extract_strided_slice %20 {offsets = [16, 0], sizes = [8, 32], strides = [1, 1]} : vector<32x32xf32> to vector<8x32xf32>
    %cst_26 = arith.constant dense<0.000000e+00> : vector<16x32xf32>
    %92 = tpu.matmul %90, %91, %cst_26 {dimension_numbers = #tpu.dot_dimension_numbers<[1], [0], [0], [1], [0, 0, 1, 1], [], []>} : vector<16x8xf32>, vector<8x32xf32>, vector<16x32xf32> -> vector<16x32xf32>
    %93 = arith.addf %69, %92 : vector<16x32xf32>
    %94 = vector.extract_strided_slice %17 {offsets = [0, 24], sizes = [16, 8], strides = [1, 1]} : vector<16x32xf32> to vector<16x8xf32>
    %95 = vector.shape_cast %94 : vector<16x8xf32> to vector<2x8x8xf32>
    %96 = vector.extract_strided_slice %18 {offsets = [0, 24], sizes = [16, 8], strides = [1, 1]} : vector<16x32xf32> to vector<16x8xf32>
    %97 = vector.shape_cast %96 : vector<16x8xf32> to vector<2x8x8xf32>
    %98 = vector.extract_strided_slice %19 {offsets = [0, 24], sizes = [16, 8], strides = [1, 1]} : vector<16x32xf32> to vector<16x8xf32>
    %99 = vector.shape_cast %98 : vector<16x8xf32> to vector<2x8x8xf32>
    "tpu.trace_start"() <{level = 10 : i32, message = "bqd,bkd->bqk"}> : () -> ()
    %cst_27 = arith.constant dense<0.000000e+00> : vector<2x8x8xf32>
    %100 = tpu.matmul %95, %97, %cst_27 {dimension_numbers = #tpu.dot_dimension_numbers<[2], [2], [1], [1], [0, 0, 0, 1, 1, 1], [0], [0]>} : vector<2x8x8xf32>, vector<2x8x8xf32>, vector<2x8x8xf32> -> vector<2x8x8xf32>
    "tpu.trace_stop"() : () -> ()
    %101 = vector.broadcast %1 : vector<2x1x8xf32> to vector<2x8x8xf32>
    %102 = arith.addf %100, %101 : vector<2x8x8xf32>
    %cst_28 = arith.constant dense<0xFF800000> : vector<2x8xf32>
    %103 = vector.multi_reduction <maximumf>, %102, %cst_28 [2] : vector<2x8x8xf32> to vector<2x8xf32>
    %104 = vector.shape_cast %103 : vector<2x8xf32> to vector<2x8x1xf32>
    %105 = vector.broadcast %104 : vector<2x8x1xf32> to vector<2x8x8xf32>
    %106 = arith.subf %102, %105 : vector<2x8x8xf32>
    %107 = math.exp %106 : vector<2x8x8xf32>
    %cst_29 = arith.constant dense<0.000000e+00> : vector<2x8xf32>
    %108 = vector.multi_reduction <add>, %107, %cst_29 [2] : vector<2x8x8xf32> to vector<2x8xf32>
    %109 = vector.shape_cast %108 : vector<2x8xf32> to vector<2x8x1xf32>
    %110 = tpu.reciprocal %109 {approx = true} : vector<2x8x1xf32> -> vector<2x8x1xf32>
    %111 = vector.broadcast %110 : vector<2x8x1xf32> to vector<2x8x8xf32>
    %112 = arith.mulf %107, %111 : vector<2x8x8xf32>
    "tpu.trace_start"() <{level = 10 : i32, message = "bqk,bkd->bqd"}> : () -> ()
    %cst_30 = arith.constant dense<0.000000e+00> : vector<2x8x8xf32>
    %113 = tpu.matmul %112, %99, %cst_30 {dimension_numbers = #tpu.dot_dimension_numbers<[2], [1], [1], [2], [0, 0, 0, 1, 1, 2], [0], [0]>} : vector<2x8x8xf32>, vector<2x8x8xf32>, vector<2x8x8xf32> -> vector<2x8x8xf32>
    "tpu.trace_stop"() : () -> ()
    %114 = vector.shape_cast %113 : vector<2x8x8xf32> to vector<16x8xf32>
    %115 = vector.extract_strided_slice %20 {offsets = [24, 0], sizes = [8, 32], strides = [1, 1]} : vector<32x32xf32> to vector<8x32xf32>
    %cst_31 = arith.constant dense<0.000000e+00> : vector<16x32xf32>
    %116 = tpu.matmul %114, %115, %cst_31 {dimension_numbers = #tpu.dot_dimension_numbers<[1], [0], [0], [1], [0, 0, 1, 1], [], []>} : vector<16x8xf32>, vector<8x32xf32>, vector<16x32xf32> -> vector<16x32xf32>
    %117 = arith.addf %93, %116 : vector<16x32xf32>
    %118 = vector.broadcast %5 : vector<1x32xf32> to vector<16x32xf32>
    %119 = arith.addf %117, %118 : vector<16x32xf32>
    %120 = arith.addf %0, %119 : vector<16x32xf32>
    %cst_32 = arith.constant dense<0.000000e+00> : vector<16xf32>
    %121 = vector.multi_reduction <add>, %120, %cst_32 [1] : vector<16x32xf32> to vector<16xf32>
    %122 = vector.shape_cast %121 : vector<16xf32> to vector<16x1xf32>
    %cst_33 = arith.constant 3.200000e+01 : f32
    %123 = vector.broadcast %cst_33 : f32 to vector<16x1xf32>
    %124 = arith.divf %122, %123 : vector<16x1xf32>
    %125 = vector.broadcast %124 : vector<16x1xf32> to vector<16x32xf32>
    %126 = arith.subf %120, %125 : vector<16x32xf32>
    %127 = arith.mulf %126, %126 : vector<16x32xf32>
    %cst_34 = arith.constant dense<0.000000e+00> : vector<16xf32>
    %128 = vector.multi_reduction <add>, %127, %cst_34 [1] : vector<16x32xf32> to vector<16xf32>
    %129 = vector.shape_cast %128 : vector<16xf32> to vector<16x1xf32>
    %cst_35 = arith.constant 3.200000e+01 : f32
    %130 = vector.broadcast %cst_35 : f32 to vector<16x1xf32>
    %131 = arith.divf %129, %130 : vector<16x1xf32>
    %cst_36 = arith.constant 9.99999974E-6 : f32
    %132 = vector.broadcast %cst_36 : f32 to vector<16x1xf32>
    %133 = arith.addf %131, %132 : vector<16x1xf32>
    %134 = math.rsqrt %133 : vector<16x1xf32>
    %135 = vector.broadcast %134 : vector<16x1xf32> to vector<16x32xf32>
    %136 = arith.mulf %126, %135 : vector<16x32xf32>
    %137 = vector.broadcast %7 : vector<1x32xf32> to vector<16x32xf32>
    %138 = arith.mulf %136, %137 : vector<16x32xf32>
    %139 = vector.broadcast %8 : vector<1x32xf32> to vector<16x32xf32>
    %140 = arith.addf %138, %139 : vector<16x32xf32>
    %c0_37 = arith.constant 0 : index
    %c0_38 = arith.constant 0 : index
    %141 = vector.load %arg4[%c0_37, %c0_38] : memref<32x64xf32, #tpu.memory_space<vmem>>, vector<32x64xf32>
    %cst_39 = arith.constant dense<0.000000e+00> : vector<16x64xf32>
    %142 = tpu.matmul %140, %141, %cst_39 {dimension_numbers = #tpu.dot_dimension_numbers<[1], [0], [0], [1], [0, 0, 1, 1], [], []>} : vector<16x32xf32>, vector<32x64xf32>, vector<16x64xf32> -> vector<16x64xf32>
    %143 = vector.broadcast %4 : vector<1x64xf32> to vector<16x64xf32>
    %144 = arith.addf %142, %143 : vector<16x64xf32>
    %cst_40 = arith.constant 0.000000e+00 : f32
    %145 = vector.broadcast %cst_40 : f32 to vector<16x64xf32>
    %146 = arith.maximumf %144, %145 : vector<16x64xf32>
    %c0_41 = arith.constant 0 : index
    %c0_42 = arith.constant 0 : index
    %147 = vector.load %arg5[%c0_41, %c0_42] : memref<64x32xf32, #tpu.memory_space<vmem>>, vector<64x32xf32>
    %cst_43 = arith.constant dense<0.000000e+00> : vector<16x32xf32>
    %148 = tpu.matmul %146, %147, %cst_43 {dimension_numbers = #tpu.dot_dimension_numbers<[1], [0], [0], [1], [0, 0, 1, 1], [], []>} : vector<16x64xf32>, vector<64x32xf32>, vector<16x32xf32> -> vector<16x32xf32>
    %149 = vector.broadcast %6 : vector<1x32xf32> to vector<16x32xf32>
    %150 = arith.addf %148, %149 : vector<16x32xf32>
    %151 = arith.addf %140, %150 : vector<16x32xf32>
    %cst_44 = arith.constant dense<0.000000e+00> : vector<16xf32>
    %152 = vector.multi_reduction <add>, %151, %cst_44 [1] : vector<16x32xf32> to vector<16xf32>
    %153 = vector.shape_cast %152 : vector<16xf32> to vector<16x1xf32>
    %cst_45 = arith.constant 3.200000e+01 : f32
    %154 = vector.broadcast %cst_45 : f32 to vector<16x1xf32>
    %155 = arith.divf %153, %154 : vector<16x1xf32>
    %156 = vector.broadcast %155 : vector<16x1xf32> to vector<16x32xf32>
    %157 = arith.subf %151, %156 : vector<16x32xf32>
    %158 = arith.mulf %157, %157 : vector<16x32xf32>
    %cst_46 = arith.constant dense<0.000000e+00> : vector<16xf32>
    %159 = vector.multi_reduction <add>, %158, %cst_46 [1] : vector<16x32xf32> to vector<16xf32>
    %160 = vector.shape_cast %159 : vector<16xf32> to vector<16x1xf32>
    %cst_47 = arith.constant 3.200000e+01 : f32
    %161 = vector.broadcast %cst_47 : f32 to vector<16x1xf32>
    %162 = arith.divf %160, %161 : vector<16x1xf32>
    %cst_48 = arith.constant 9.99999974E-6 : f32
    %163 = vector.broadcast %cst_48 : f32 to vector<16x1xf32>
    %164 = arith.addf %162, %163 : vector<16x1xf32>
    %165 = math.rsqrt %164 : vector<16x1xf32>
    %166 = vector.broadcast %165 : vector<16x1xf32> to vector<16x32xf32>
    %167 = arith.mulf %157, %166 : vector<16x32xf32>
    %168 = vector.broadcast %9 : vector<1x32xf32> to vector<16x32xf32>
    %169 = arith.mulf %167, %168 : vector<16x32xf32>
    %170 = vector.broadcast %10 : vector<1x32xf32> to vector<16x32xf32>
    %171 = arith.addf %169, %170 : vector<16x32xf32>
    %c0_49 = arith.constant 0 : index
    %c0_50 = arith.constant 0 : index
    %172 = vector.load %arg7[%c0_49, %c0_50] : memref<16x32xf32, #tpu.memory_space<vmem>>, vector<16x32xf32>
    tpu.vector_store %arg7[%c0_49, %c0_50], %171 {strides = array<i32>} : memref<16x32xf32, #tpu.memory_space<vmem>>, vector<16x32xf32>,
    return
  }
}

</mosaic_0001>

<llo_original>
// kernel: tpu_custom_call.1
$region0: #{tpu_custom_call.1}
  #allocation0 [shape = 'u32[]', space=smem, size = 0x4, offset = 0x4, fixed_abs, tag = 'smem constant byte address 0x4 - core index']
  #allocation1 [shape = 'u32[144,128]{1,0:T(1,128)}', space=vmem, size = 0x12000, scoped, tag = 'internal scratch']
  %s0 = inlined_call_operand.hbm [shape: f32[16,32], index: 0, kind: input, shape index: {}]
  %s1 = inlined_call_operand.vmem [shape: f32[2,1,8], index: 1, kind: input, shape index: {}]
  %s2 = inlined_call_operand.vmem [shape: f32[32,96], index: 2, kind: input, shape index: {}]
  %s3 = inlined_call_operand.vmem [shape: f32[32,32], index: 3, kind: input, shape index: {}]
  %s4 = inlined_call_operand.vmem [shape: f32[32,64], index: 4, kind: input, shape index: {}]
  %s5 = inlined_call_operand.vmem [shape: f32[64,32], index: 5, kind: input, shape index: {}]
  %s6 = inlined_call_operand.vmem [shape: f32[8,96], index: 6, kind: input, shape index: {}]
  %s7 = inlined_call_operand.hbm [shape: f32[16,32], index: 7, kind: output, shape index: {}]
  %s8 = sld [smem:[#allocation0]]
  $region42: #{tpu_custom_call.1} parent=0
    _
  %s10 = ssub.s32 1, %s8
  %s11 = scalar_select 0, %s10, %s8
  $region1: #{tpu_custom_call.1} parent=0
    #allocation2 [shape = 'u8[8192]{0}', space=vmem, size = 0x2000, scoped, tag = 'input window, operand 0, single buffered']
    #allocation3 [shape = 's32[1]{0}', space=sflag, size = 0x4, scoped, tag = 'scoped memory for tpu_custom_call.1']
    #allocation4 [shape = 's32[1]{0}', space=sflag, size = 0x4, scoped, tag = 'scoped memory for tpu_custom_call.1']
    #allocation5 [shape = 'u8[8192]{0}', space=vmem, size = 0x2000, scoped, tag = 'output window, operand 0, single buffered']
    %12 = vsyncpa [#allocation3], 0
    %13 = vsyncpa [#allocation4], 0
    // Predicated region
    $region2: #{tpu_custom_call.1} parent=1 // pred_check
      _
    $region3: #{tpu_custom_call.1} parent=1 // pred_check_branch
      %15 = sbr.rel (0) target = $region5
    $region4: #{tpu_custom_call.1} parent=1 // pred_region
      %s17 = ssub.s32 256, 256
      %18 = vsyncadd [#allocation3], %s17
      %s19 = sshll.u32 [#allocation2], 4
      %s20 = int_to_ptr.vmem [resolvable:$true] %s19
      %25 = dma.hbm_to_vmem [thread:$0]  %s0, 256, %s20, [#allocation3], 128, 128, 8
    $region5: #{tpu_custom_call.1} parent=1 // pred_fallthru
      _
    // Predicated region
    $region6: #{tpu_custom_call.1} parent=1 // pred_check
      _
    $region7: #{tpu_custom_call.1} parent=1 // pred_check_branch
      %27 = sbr.rel (0) target = $region9
    $region8: #{tpu_custom_call.1} parent=1 // pred_region
      _
    $region9: #{tpu_custom_call.1} parent=1 // pred_fallthru
      _
    // Predicated region
    $region10: #{tpu_custom_call.1} parent=1 // pred_check
      _
    $region11: #{tpu_custom_call.1} parent=1 // pred_check_branch
      %29 = sbr.rel (0) target = $region13
    $region12: #{tpu_custom_call.1} parent=1 // pred_region
      _
    $region13: #{tpu_custom_call.1} parent=1 // pred_fallthru
      _
    // Predicated region
    $region14: #{tpu_custom_call.1} parent=1 // pred_check
      _
    $region15: #{tpu_custom_call.1} parent=1 // pred_check_branch
      %31 = sbr.rel (0) target = $region17
    $region16: #{tpu_custom_call.1} parent=1 // pred_region
      _
    $region17: #{tpu_custom_call.1} parent=1 // pred_fallthru
      _
    // Predicated region
    $region18: #{tpu_custom_call.1} parent=1 // pred_check
      _
    $region19: #{tpu_custom_call.1} parent=1 // pred_check_branch
      %33 = sbr.rel (0) target = $region21
    $region20: #{tpu_custom_call.1} parent=1 // pred_region
      _
    $region21: #{tpu_custom_call.1} parent=1 // pred_fallthru
      _
    // Predicated region
    $region22: #{tpu_custom_call.1} parent=1 // pred_check
      _
    $region23: #{tpu_custom_call.1} parent=1 // pred_check_branch
      %35 = sbr.rel (0) target = $region25
    $region24: #{tpu_custom_call.1} parent=1 // pred_region
      _
    $region25: #{tpu_custom_call.1} parent=1 // pred_fallthru
      _
    // Predicated region
    $region26: #{tpu_custom_call.1} parent=1 // pred_check
      _
    $region27: #{tpu_custom_call.1} parent=1 // pred_check_branch
      %37 = sbr.rel (0) target = $region29
    $region28: #{tpu_custom_call.1} parent=1 // pred_region
      _
    $region29: #{tpu_custom_call.1} parent=1 // pred_fallthru
      _
    // Predicated region
    $region30: #{tpu_custom_call.1} parent=1 // pred_check
      _
    $region31: #{tpu_custom_call.1} parent=1 // pred_check_branch
      %39 = sbr.rel (0) target = $region33
    $region32: #{tpu_custom_call.1} parent=1 // pred_region
      %40 = dma.done [#allocation3], 256
    $region33: #{tpu_custom_call.1} parent=1 // pred_fallthru
      _
    %v41 = vld [vmem:[#allocation2] sm:$0xff]
    %v42 = vld [vmem:[#allocation2 + $0x8] sm:$0xff]
    %v43 = vld [vmem:[%s1] sm:$0x1]
    %v44 = vld [vmem:[%s1 + $0x1] sm:$0x1]
    %v45 = vld [vmem:[%s6] sm:$0xff]
    %v46 = vld [vmem:[%s2] sm:$0xff]
    %v47 = vld [vmem:[%s2 + $0x8] sm:$0xff]
    %v48 = vld [vmem:[%s2 + $0x10] sm:$0xff]
    %v49 = vld [vmem:[%s2 + $0x18] sm:$0xff]
    %v50 = vlaneseq
    %v51 = vshrl.u32 %v50, 7
    %v52 = vsub.s32 0, %v51
    %v53 = vrot.slane %v45, %v52
    %vm54 = vcmask 261120
    %v56 = vsel %vm54, %v41, 0
    %v59 = vsel %vm54, %v42, 0
    %61 = vmatprep.subr.mxu0 0.0
    %62 = vmatpush1.msra.mxu0 %v46
    %63 = vmatprep.subr.mxu0 0.0
    %64 = vmatpush1.msra.mxu0 %v47
    %65 = vmatprep.subr.mxu0 0.0
    %66 = vmatpush1.msra.mxu0 %v48
    %67 = vmatprep.subr.mxu0 0.0
    %68 = vmatpush1.msra.mxu0 %v49
    %69 = vmatprep.subr.mxu0 0.0
    %70 = vmatpush1.msra.mxu0 0.0
    %71 = vmatprep.subr.mxu0 0.0
    %72 = vmatpush1.msra.mxu0 0.0
    %73 = vmatprep.subr.mxu0 0.0
    %74 = vmatpush1.msra.mxu0 0.0
    %75 = vmatprep.subr.mxu0 0.0
    %76 = vmatpush1.msra.mxu0 0.0
    %77 = vmatprep.subr.mxu0 0.0
    %78 = vmatpush1.msra.mxu0 0.0
    %79 = vmatprep.subr.mxu0 0.0
    %80 = vmatpush1.msra.mxu0 0.0
    %81 = vmatprep.subr.mxu0 0.0
    %82 = vmatpush1.msra.mxu0 0.0
    %83 = vmatprep.subr.mxu0 0.0
    %84 = vmatpush1.msra.mxu0 0.0
    %85 = vmatprep.subr.mxu0 0.0
    %86 = vmatpush1.msra.mxu0 0.0
    %87 = vmatprep.subr.mxu0 0.0
    %88 = vmatpush1.msra.mxu0 0.0
    %89 = vmatprep.subr.mxu0 0.0
    %90 = vmatpush1.msra.mxu0 0.0
    %91 = vmatprep.subr.mxu0 0.0
    %92 = vmatpush1.msra.mxu0 0.0
    %93 = vmatprep.subr.mxu0 0.0
    %94 = vmatpush1.msra.mxu0 0.0
    %95 = vmatprep.subr.mxu0 0.0
    %96 = vmatpush1.msra.mxu0 0.0
    %97 = vmatprep.subr.mxu0 0.0
    %98 = vmatpush1.msra.mxu0 0.0
    %99 = vmatprep.subr.mxu0 0.0
    %100 = vmatpush1.msra.mxu0 0.0
    %101 = vmatprep.subr.mxu0 0.0
    %102 = vmatpush1.msra.mxu0 0.0
    %103 = vmatprep.subr.mxu0 0.0
    %104 = vmatpush1.msra.mxu0 0.0
    %105 = vmatprep.subr.mxu0 0.0
    %106 = vmatpush1.msra.mxu0 0.0
    %107 = vmatprep.subr.mxu0 0.0
    %108 = vmatpush1.msra.mxu0 0.0
    %109 = vmatprep.subr.mxu0 0.0
    %110 = vmatpush1.msra.mxu0 0.0
    %111 = vmatprep.subr.mxu0 0.0
    %112 = vmatpush1.msra.mxu0 0.0
    %113 = vmatprep.subr.mxu0 0.0
    %114 = vmatpush1.msra.mxu0 0.0
    %115 = vmatprep.subr.mxu0 0.0
    %116 = vmatpush1.msra.mxu0 0.0
    %117 = vmatprep.subr.mxu0 0.0
    %118 = vmatpush1.msra.mxu0 0.0
    %119 = vmatprep.subr.mxu0 0.0
    %120 = vmatpush1.msra.mxu0 0.0
    %121 = vmatprep.subr.mxu0 0.0
    %122 = vmatpush1.msra.mxu0 0.0
    %123 = vmatprep.subr.mxu0 0.0
    %124 = vmatpush1.msra.mxu0 0.0
    %125 = vmatprep.mubr.f32.mxu0 0.0
    %126 = vmatmul.mubr.f32.gmra.mrb[0].mxu0 %v56
    %v127 = vpop.f32.mrb[0].mxu0
    %v128 = vadd.f32 %v53, %v127
    %v129 = vpop.f32.mrb[0].mxu0
    %130 = vmatprep.mubr.f32.mxu0 0.0
    %131 = vmatmul.mubr.f32.gmra.mrb[0].mxu0 %v59
    %v132 = vpop.f32.mrb[0].mxu0
    %v133 = vadd.f32 %v53, %v132
    %v134 = vpop.f32.mrb[0].mxu0
    %135 = vdwg.mxu0
    %v136 = vmul.f32 %v128, 0.35355338
    %v137 = vmul.f32 %v133, 0.35355338
    %v138 = vld [vmem:[%s3] sm:$0xff]
    %v139 = vld [vmem:[%s3 + $0x8] sm:$0xff]
    %v140 = vld [vmem:[%s3 + $0x10] sm:$0xff]
    %v141 = vld [vmem:[%s3 + $0x18] sm:$0xff]
    %v144 = vlaneseq
    %v145 = vshrl.u32 %v144, 7
    %v146 = vsub.s32 0, %v145
    %v147 = vrot.slane %v43, %v146
    %v148 = vlaneseq
    %v149 = vshrl.u32 %v148, 7
    %v150 = vsub.s32 0, %v149
    %v151 = vrot.slane %v44, %v150
    %155 = vrot.lane.b32.xlu0 %v128, 96
    %v156 = vpop.permute.xlu0 %155
    %vm157 = vcmask 64512
    %v159 = vsel %vm157, %v136, 0
    %v161 = vsel %vm157, %v156, 0
    %163 = vmatprep.subr.mxu0 0.0
    %164 = vmatpush1.xpose.msra.mxu0 %v161
    %165 = vmatprep.subr.mxu0 0.0
    %166 = vmatpush1.xpose.msra.mxu0 0.0
    %167 = vmatprep.subr.mxu0 0.0
    %168 = vmatpush1.xpose.msra.mxu0 0.0
    %169 = vmatprep.subr.mxu0 0.0
    %170 = vmatpush1.xpose.msra.mxu0 0.0
    %171 = vmatprep.subr.mxu0 0.0
    %172 = vmatpush1.xpose.msra.mxu0 0.0
    %173 = vmatprep.subr.mxu0 0.0
    %174 = vmatpush1.xpose.msra.mxu0 0.0
    %175 = vmatprep.subr.mxu0 0.0
    %176 = vmatpush1.xpose.msra.mxu0 0.0
    %177 = vmatprep.subr.mxu0 0.0
    %178 = vmatpush1.xpose.msra.mxu0 0.0
    %179 = vmatprep.subr.mxu0 0.0
    %180 = vmatpush1.xpose.msra.mxu0 0.0
    %181 = vmatprep.subr.mxu0 0.0
    %182 = vmatpush1.xpose.msra.mxu0 0.0
    %183 = vmatprep.subr.mxu0 0.0
    %184 = vmatpush1.xpose.msra.mxu0 0.0
    %185 = vmatprep.subr.mxu0 0.0
    %186 = vmatpush1.xpose.msra.mxu0 0.0
    %187 = vmatprep.subr.mxu0 0.0
    %188 = vmatpush1.xpose.msra.mxu0 0.0
    %189 = vmatprep.subr.mxu0 0.0
    %190 = vmatpush1.xpose.msra.mxu0 0.0
    %191 = vmatprep.subr.mxu0 0.0
    %192 = vmatpush1.xpose.msra.mxu0 0.0
    %193 = vmatprep.subr.mxu0 0.0
    %194 = vmatpush1.xpose.msra.mxu0 0.0
    %195 = vmatprep.subr.mxu0 0.0
    %196 = vmatpush1.xpose.msra.mxu0 0.0
    %197 = vmatprep.subr.mxu0 0.0
    %198 = vmatpush1.xpose.msra.mxu0 0.0
    %199 = vmatprep.subr.mxu0 0.0
    %200 = vmatpush1.xpose.msra.mxu0 0.0
    %201 = vmatprep.subr.mxu0 0.0
    %202 = vmatpush1.xpose.msra.mxu0 0.0
    %203 = vmatprep.subr.mxu0 0.0
    %204 = vmatpush1.xpose.msra.mxu0 0.0
    %205 = vmatprep.subr.mxu0 0.0
    %206 = vmatpush1.xpose.msra.mxu0 0.0
    %207 = vmatprep.subr.mxu0 0.0
    %208 = vmatpush1.xpose.msra.mxu0 0.0
    %209 = vmatprep.subr.mxu0 0.0
    %210 = vmatpush1.xpose.msra.mxu0 0.0
    %211 = vmatprep.subr.mxu0 0.0
    %212 = vmatpush1.xpose.msra.mxu0 0.0
    %213 = vmatprep.subr.mxu0 0.0
    %214 = vmatpush1.xpose.msra.mxu0 0.0
    %215 = vmatprep.subr.mxu0 0.0
    %216 = vmatpush1.xpose.msra.mxu0 0.0
    %217 = vmatprep.subr.mxu0 0.0
    %218 = vmatpush1.xpose.msra.mxu0 0.0
    %219 = vmatprep.subr.mxu0 0.0
    %220 = vmatpush1.xpose.msra.mxu0 0.0
    %221 = vmatprep.subr.mxu0 0.0
    %222 = vmatpush1.xpose.msra.mxu0 0.0
    %223 = vmatprep.subr.mxu0 0.0
    %224 = vmatpush1.xpose.msra.mxu0 0.0
    %225 = vmatprep.subr.mxu0 0.0
    %226 = vmatpush1.xpose.msra.mxu0 0.0
    %227 = vmatprep.mubr.f32.mxu0 0.0
    %228 = vmatmul.mubr.f32.gmra.mrb[0].mxu0 %v159
    %v229 = vpop.f32.mrb[0].mxu0
    %v230 = vadd.f32 %v147, %v229
    %v231 = vpop.f32.mrb[0].mxu0
    %232 = vdwg.mxu0
    %234 = vrot.lane.b32.xlu0 %v133, 96
    %v235 = vpop.permute.xlu0 %234
    %v237 = vsel %vm157, %v137, 0
    %v239 = vsel %vm157, %v235, 0
    %241 = vmatprep.subr.mxu0 0.0
    %242 = vmatpush1.xpose.msra.mxu0 %v239
    %243 = vmatprep.subr.mxu0 0.0
    %244 = vmatpush1.xpose.msra.mxu0 0.0
    %245 = vmatprep.subr.mxu0 0.0
    %246 = vmatpush1.xpose.msra.mxu0 0.0
    %247 = vmatprep.subr.mxu0 0.0
    %248 = vmatpush1.xpose.msra.mxu0 0.0
    %249 = vmatprep.subr.mxu0 0.0
    %250 = vmatpush1.xpose.msra.mxu0 0.0
    %251 = vmatprep.subr.mxu0 0.0
    %252 = vmatpush1.xpose.msra.mxu0 0.0
    %253 = vmatprep.subr.mxu0 0.0
    %254 = vmatpush1.xpose.msra.mxu0 0.0
    %255 = vmatprep.subr.mxu0 0.0
    %256 = vmatpush1.xpose.msra.mxu0 0.0
    %257 = vmatprep.subr.mxu0 0.0
    %258 = vmatpush1.xpose.msra.mxu0 0.0
    %259 = vmatprep.subr.mxu0 0.0
    %260 = vmatpush1.xpose.msra.mxu0 0.0
    %261 = vmatprep.subr.mxu0 0.0
    %262 = vmatpush1.xpose.msra.mxu0 0.0
    %263 = vmatprep.subr.mxu0 0.0
    %264 = vmatpush1.xpose.msra.mxu0 0.0
    %265 = vmatprep.subr.mxu0 0.0
    %266 = vmatpush1.xpose.msra.mxu0 0.0
    %267 = vmatprep.subr.mxu0 0.0
    %268 = vmatpush1.xpose.msra.mxu0 0.0
    %269 = vmatprep.subr.mxu0 0.0
    %270 = vmatpush1.xpose.msra.mxu0 0.0
    %271 = vmatprep.subr.mxu0 0.0
    %272 = vmatpush1.xpose.msra.mxu0 0.0
    %273 = vmatprep.subr.mxu0 0.0
    %274 = vmatpush1.xpose.msra.mxu0 0.0
    %275 = vmatprep.subr.mxu0 0.0
    %276 = vmatpush1.xpose.msra.mxu0 0.0
    %277 = vmatprep.subr.mxu0 0.0
    %278 = vmatpush1.xpose.msra.mxu0 0.0
    %279 = vmatprep.subr.mxu0 0.0
    %280 = vmatpush1.xpose.msra.mxu0 0.0
    %281 = vmatprep.subr.mxu0 0.0
    %282 = vmatpush1.xpose.msra.mxu0 0.0
    %283 = vmatprep.subr.mxu0 0.0
    %284 = vmatpush1.xpose.msra.mxu0 0.0
    %285 = vmatprep.subr.mxu0 0.0
    %286 = vmatpush1.xpose.msra.mxu0 0.0
    %287 = vmatprep.subr.mxu0 0.0
    %288 = vmatpush1.xpose.msra.mxu0 0.0
    %289 = vmatprep.subr.mxu0 0.0
    %290 = vmatpush1.xpose.msra.mxu0 0.0
    %291 = vmatprep.subr.mxu0 0.0
    %292 = vmatpush1.xpose.msra.mxu0 0.0
    %293 = vmatprep.subr.mxu0 0.0
    %294 = vmatpush1.xpose.msra.mxu0 0.0
    %295 = vmatprep.subr.mxu0 0.0
    %296 = vmatpush1.xpose.msra.mxu0 0.0
    %297 = vmatprep.subr.mxu0 0.0
    %298 = vmatpush1.xpose.msra.mxu0 0.0
    %299 = vmatprep.subr.mxu0 0.0
    %300 = vmatpush1.xpose.msra.mxu0 0.0
    %301 = vmatprep.subr.mxu0 0.0
    %302 = vmatpush1.xpose.msra.mxu0 0.0
    %303 = vmatprep.subr.mxu0 0.0
    %304 = vmatpush1.xpose.msra.mxu0 0.0
    %305 = vmatprep.mubr.f32.mxu0 0.0
    %306 = vmatmul.mubr.f32.gmra.mrb[0].mxu0 %v237
    %v307 = vpop.f32.mrb[0].mxu0
    %v308 = vadd.f32 %v151, %v307
    %v309 = vpop.f32.mrb[0].mxu0
    %310 = vdwg.mxu0
    %v311 = vsel %vm157, %v230, -inf
    %312 = vmax.xlane.f32.xlu0 %v311
    %v313 = vpop.xlane.xlu0 %312
    %v314 = vsel %vm157, %v308, -inf
    %315 = vmax.xlane.f32.xlu0 %v314
    %v316 = vpop.xlane.xlu0 %315
    %v317 = vsub.f32 %v230, %v313
    %v318 = vsub.f32 %v308, %v316
    %v319 = vmul.f32 %v317, 1.442695
    %v320 = vpow.pop %v319
    %v321 = vmul.f32 %v318, 1.442695
    %v322 = vpow.pop %v321
    %v323 = vsel %vm157, %v320, 0.0
    %324 = vadd.xlane.f32.xlu0 %v323
    %v325 = vpop.xlane.xlu0 %324
    %v326 = vsel %vm157, %v322, 0.0
    %327 = vadd.xlane.f32.xlu0 %v326
    %v328 = vpop.xlane.xlu0 %327
    %v329 = vrcp.pop %v325
    %v330 = vrcp.pop %v328
    %v331 = vmul.f32 %v320, %v329
    %v332 = vmul.f32 %v322, %v330
    %333 = vrot.lane.b32.xlu0 %v128, 64
    %v334 = vpop.permute.xlu0 %333
    %v337 = vsel %vm157, %v331, 0
    %339 = vmatprep.subr.mxu0 0.0
    %340 = vmatpush1.msra.mxu0 %v334
    %341 = vmatprep.subr.mxu0 0.0
    %342 = vmatpush1.msra.mxu0 0.0
    %343 = vmatprep.subr.mxu0 0.0
    %344 = vmatpush1.msra.mxu0 0.0
    %345 = vmatprep.subr.mxu0 0.0
    %346 = vmatpush1.msra.mxu0 0.0
    %347 = vmatprep.subr.mxu0 0.0
    %348 = vmatpush1.msra.mxu0 0.0
    %349 = vmatprep.subr.mxu0 0.0
    %350 = vmatpush1.msra.mxu0 0.0
    %351 = vmatprep.subr.mxu0 0.0
    %352 = vmatpush1.msra.mxu0 0.0
    %353 = vmatprep.subr.mxu0 0.0
    %354 = vmatpush1.msra.mxu0 0.0
    %355 = vmatprep.subr.mxu0 0.0
    %356 = vmatpush1.msra.mxu0 0.0
    %357 = vmatprep.subr.mxu0 0.0
    %358 = vmatpush1.msra.mxu0 0.0
    %359 = vmatprep.subr.mxu0 0.0
    %360 = vmatpush1.msra.mxu0 0.0
    %361 = vmatprep.subr.mxu0 0.0
    %362 = vmatpush1.msra.mxu0 0.0
    %363 = vmatprep.subr.mxu0 0.0
    %364 = vmatpush1.msra.mxu0 0.0
    %365 = vmatprep.subr.mxu0 0.0
    %366 = vmatpush1.msra.mxu0 0.0
    %367 = vmatprep.subr.mxu0 0.0
    %368 = vmatpush1.msra.mxu0 0.0
    %369 = vmatprep.subr.mxu0 0.0
    %370 = vmatpush1.msra.mxu0 0.0
    %371 = vmatprep.subr.mxu0 0.0
    %372 = vmatpush1.msra.mxu0 0.0
    %373 = vmatprep.subr.mxu0 0.0
    %374 = vmatpush1.msra.mxu0 0.0
    %375 = vmatprep.subr.mxu0 0.0
    %376 = vmatpush1.msra.mxu0 0.0
    %377 = vmatprep.subr.mxu0 0.0
    %378 = vmatpush1.msra.mxu0 0.0
    %379 = vmatprep.subr.mxu0 0.0
    %380 = vmatpush1.msra.mxu0 0.0
    %381 = vmatprep.subr.mxu0 0.0
    %382 = vmatpush1.msra.mxu0 0.0
    %383 = vmatprep.subr.mxu0 0.0
    %384 = vmatpush1.msra.mxu0 0.0
    %385 = vmatprep.subr.mxu0 0.0
    %386 = vmatpush1.msra.mxu0 0.0
    %387 = vmatprep.subr.mxu0 0.0
    %388 = vmatpush1.msra.mxu0 0.0
    %389 = vmatprep.subr.mxu0 0.0
    %390 = vmatpush1.msra.mxu0 0.0
    %391 = vmatprep.subr.mxu0 0.0
    %392 = vmatpush1.msra.mxu0 0.0
    %393 = vmatprep.subr.mxu0 0.0
    %394 = vmatpush1.msra.mxu0 0.0
    %395 = vmatprep.subr.mxu0 0.0
    %396 = vmatpush1.msra.mxu0 0.0
    %397 = vmatprep.subr.mxu0 0.0
    %398 = vmatpush1.msra.mxu0 0.0
    %399 = vmatprep.subr.mxu0 0.0
    %400 = vmatpush1.msra.mxu0 0.0
    %401 = vmatprep.subr.mxu0 0.0
    %402 = vmatpush1.msra.mxu0 0.0
    %403 = vmatprep.mubr.f32.mxu0 0.0
    %404 = vmatmul.mubr.f32.gmra.mrb[0].mxu0 %v337
    %v405 = vpop.f32.mrb[0].mxu0
    %v406 = vadd.f32 0.0, %v405
    %v407 = vpop.f32.mrb[0].mxu0
    %408 = vdwg.mxu0
    %409 = vrot.lane.b32.xlu0 %v133, 64
    %v410 = vpop.permute.xlu0 %409
    %v413 = vsel %vm157, %v332, 0
    %415 = vmatprep.subr.mxu0 0.0
    %416 = vmatpush1.msra.mxu0 %v410
    %417 = vmatprep.subr.mxu0 0.0
    %418 = vmatpush1.msra.mxu0 0.0
    %419 = vmatprep.subr.mxu0 0.0
    %420 = vmatpush1.msra.mxu0 0.0
    %421 = vmatprep.subr.mxu0 0.0
    %422 = vmatpush1.msra.mxu0 0.0
    %423 = vmatprep.subr.mxu0 0.0
    %424 = vmatpush1.msra.mxu0 0.0
    %425 = vmatprep.subr.mxu0 0.0
    %426 = vmatpush1.msra.mxu0 0.0
    %427 = vmatprep.subr.mxu0 0.0
    %428 = vmatpush1.msra.mxu0 0.0
    %429 = vmatprep.subr.mxu0 0.0
    %430 = vmatpush1.msra.mxu0 0.0
    %431 = vmatprep.subr.mxu0 0.0
    %432 = vmatpush1.msra.mxu0 0.0
    %433 = vmatprep.subr.mxu0 0.0
    %434 = vmatpush1.msra.mxu0 0.0
    %435 = vmatprep.subr.mxu0 0.0
    %436 = vmatpush1.msra.mxu0 0.0
    %437 = vmatprep.subr.mxu0 0.0
    %438 = vmatpush1.msra.mxu0 0.0
    %439 = vmatprep.subr.mxu0 0.0
    %440 = vmatpush1.msra.mxu0 0.0
    %441 = vmatprep.subr.mxu0 0.0
    %442 = vmatpush1.msra.mxu0 0.0
    %443 = vmatprep.subr.mxu0 0.0
    %444 = vmatpush1.msra.mxu0 0.0
    %445 = vmatprep.subr.mxu0 0.0
    %446 = vmatpush1.msra.mxu0 0.0
    %447 = vmatprep.subr.mxu0 0.0
    %448 = vmatpush1.msra.mxu0 0.0
    %449 = vmatprep.subr.mxu0 0.0
    %450 = vmatpush1.msra.mxu0 0.0
    %451 = vmatprep.subr.mxu0 0.0
    %452 = vmatpush1.msra.mxu0 0.0
    %453 = vmatprep.subr.mxu0 0.0
    %454 = vmatpush1.msra.mxu0 0.0
    %455 = vmatprep.subr.mxu0 0.0
    %456 = vmatpush1.msra.mxu0 0.0
    %457 = vmatprep.subr.mxu0 0.0
    %458 = vmatpush1.msra.mxu0 0.0
    %459 = vmatprep.subr.mxu0 0.0
    %460 = vmatpush1.msra.mxu0 0.0
    %461 = vmatprep.subr.mxu0 0.0
    %462 = vmatpush1.msra.mxu0 0.0
    %463 = vmatprep.subr.mxu0 0.0
    %464 = vmatpush1.msra.mxu0 0.0
    %465 = vmatprep.subr.mxu0 0.0
    %466 = vmatpush1.msra.mxu0 0.0
    %467 = vmatprep.subr.mxu0 0.0
    %468 = vmatpush1.msra.mxu0 0.0
    %469 = vmatprep.subr.mxu0 0.0
    %470 = vmatpush1.msra.mxu0 0.0
    %471 = vmatprep.subr.mxu0 0.0
    %472 = vmatpush1.msra.mxu0 0.0
    %473 = vmatprep.subr.mxu0 0.0
    %474 = vmatpush1.msra.mxu0 0.0
    %475 = vmatprep.subr.mxu0 0.0
    %476 = vmatpush1.msra.mxu0 0.0
    %477 = vmatprep.subr.mxu0 0.0
    %478 = vmatpush1.msra.mxu0 0.0
    %479 = vmatprep.mubr.f32.mxu0 0.0
    %480 = vmatmul.mubr.f32.gmra.mrb[0].mxu0 %v413
    %v481 = vpop.f32.mrb[0].mxu0
    %v482 = vadd.f32 0.0, %v481
    %v483 = vpop.f32.mrb[0].mxu0
    %484 = vdwg.mxu0
    %485 = vrot.lane.b32.xlu0 %v136, 120
    %v486 = vpop.permute.xlu0 %485
    %487 = vrot.lane.b32.xlu0 %v128, 88
    %v488 = vpop.permute.xlu0 %487
    %v489 = vsel %vm157, %v486, 0
    %v491 = vsel %vm157, %v488, 0
    %493 = vmatprep.subr.mxu0 0.0
    %494 = vmatpush1.xpose.msra.mxu0 %v491
    %495 = vmatprep.subr.mxu0 0.0
    %496 = vmatpush1.xpose.msra.mxu0 0.0
    %497 = vmatprep.subr.mxu0 0.0
    %498 = vmatpush1.xpose.msra.mxu0 0.0
    %499 = vmatprep.subr.mxu0 0.0
    %500 = vmatpush1.xpose.msra.mxu0 0.0
    %501 = vmatprep.subr.mxu0 0.0
    %502 = vmatpush1.xpose.msra.mxu0 0.0
    %503 = vmatprep.subr.mxu0 0.0
    %504 = vmatpush1.xpose.msra.mxu0 0.0
    %505 = vmatprep.subr.mxu0 0.0
    %506 = vmatpush1.xpose.msra.mxu0 0.0
    %507 = vmatprep.subr.mxu0 0.0
    %508 = vmatpush1.xpose.msra.mxu0 0.0
    %509 = vmatprep.subr.mxu0 0.0
    %510 = vmatpush1.xpose.msra.mxu0 0.0
    %511 = vmatprep.subr.mxu0 0.0
    %512 = vmatpush1.xpose.msra.mxu0 0.0
    %513 = vmatprep.subr.mxu0 0.0
    %514 = vmatpush1.xpose.msra.mxu0 0.0
    %515 = vmatprep.subr.mxu0 0.0
    %516 = vmatpush1.xpose.msra.mxu0 0.0
    %517 = vmatprep.subr.mxu0 0.0
    %518 = vmatpush1.xpose.msra.mxu0 0.0
    %519 = vmatprep.subr.mxu0 0.0
    %520 = vmatpush1.xpose.msra.mxu0 0.0
    %521 = vmatprep.subr.mxu0 0.0
    %522 = vmatpush1.xpose.msra.mxu0 0.0
    %523 = vmatprep.subr.mxu0 0.0
    %524 = vmatpush1.xpose.msra.mxu0 0.0
    %525 = vmatprep.subr.mxu0 0.0
    %526 = vmatpush1.xpose.msra.mxu0 0.0
    %527 = vmatprep.subr.mxu0 0.0
    %528 = vmatpush1.xpose.msra.mxu0 0.0
    %529 = vmatprep.subr.mxu0 0.0
    %530 = vmatpush1.xpose.msra.mxu0 0.0
    %531 = vmatprep.subr.mxu0 0.0
    %532 = vmatpush1.xpose.msra.mxu0 0.0
    %533 = vmatprep.subr.mxu0 0.0
    %534 = vmatpush1.xpose.msra.mxu0 0.0
    %535 = vmatprep.subr.mxu0 0.0
    %536 = vmatpush1.xpose.msra.mxu0 0.0
    %537 = vmatprep.subr.mxu0 0.0
    %538 = vmatpush1.xpose.msra.mxu0 0.0
    %539 = vmatprep.subr.mxu0 0.0
    %540 = vmatpush1.xpose.msra.mxu0 0.0
    %541 = vmatprep.subr.mxu0 0.0
    %542 = vmatpush1.xpose.msra.mxu0 0.0
    %543 = vmatprep.subr.mxu0 0.0
    %544 = vmatpush1.xpose.msra.mxu0 0.0
    %545 = vmatprep.subr.mxu0 0.0
    %546 = vmatpush1.xpose.msra.mxu0 0.0
    %547 = vmatprep.subr.mxu0 0.0
    %548 = vmatpush1.xpose.msra.mxu0 0.0
    %549 = vmatprep.subr.mxu0 0.0
    %550 = vmatpush1.xpose.msra.mxu0 0.0
    %551 = vmatprep.subr.mxu0 0.0
    %552 = vmatpush1.xpose.msra.mxu0 0.0
    %553 = vmatprep.subr.mxu0 0.0
    %554 = vmatpush1.xpose.msra.mxu0 0.0
    %555 = vmatprep.subr.mxu0 0.0
    %556 = vmatpush1.xpose.msra.mxu0 0.0
    %557 = vmatprep.mubr.f32.mxu0 0.0
    %558 = vmatmul.mubr.f32.gmra.mrb[0].mxu0 %v489
    %v559 = vpop.f32.mrb[0].mxu0
    %v560 = vadd.f32 %v147, %v559
    %v561 = vpop.f32.mrb[0].mxu0
    %562 = vdwg.mxu0
    %563 = vrot.lane.b32.xlu0 %v137, 120
    %v564 = vpop.permute.xlu0 %563
    %565 = vrot.lane.b32.xlu0 %v133, 88
    %v566 = vpop.permute.xlu0 %565
    %v567 = vsel %vm157, %v564, 0
    %v569 = vsel %vm157, %v566, 0
    %571 = vmatprep.subr.mxu0 0.0
    %572 = vmatpush1.xpose.msra.mxu0 %v569
    %573 = vmatprep.subr.mxu0 0.0
    %574 = vmatpush1.xpose.msra.mxu0 0.0
    %575 = vmatprep.subr.mxu0 0.0
    %576 = vmatpush1.xpose.msra.mxu0 0.0
    %577 = vmatprep.subr.mxu0 0.0
    %578 = vmatpush1.xpose.msra.mxu0 0.0
    %579 = vmatprep.subr.mxu0 0.0
    %580 = vmatpush1.xpose.msra.mxu0 0.0
    %581 = vmatprep.subr.mxu0 0.0
    %582 = vmatpush1.xpose.msra.mxu0 0.0
    %583 = vmatprep.subr.mxu0 0.0
    %584 = vmatpush1.xpose.msra.mxu0 0.0
    %585 = vmatprep.subr.mxu0 0.0
    %586 = vmatpush1.xpose.msra.mxu0 0.0
    %587 = vmatprep.subr.mxu0 0.0
    %588 = vmatpush1.xpose.msra.mxu0 0.0
    %589 = vmatprep.subr.mxu0 0.0
    %590 = vmatpush1.xpose.msra.mxu0 0.0
    %591 = vmatprep.subr.mxu0 0.0
    %592 = vmatpush1.xpose.msra.mxu0 0.0
    %593 = vmatprep.subr.mxu0 0.0
    %594 = vmatpush1.xpose.msra.mxu0 0.0
    %595 = vmatprep.subr.mxu0 0.0
    %596 = vmatpush1.xpose.msra.mxu0 0.0
    %597 = vmatprep.subr.mxu0 0.0
    %598 = vmatpush1.xpose.msra.mxu0 0.0
    %599 = vmatprep.subr.mxu0 0.0
    %600 = vmatpush1.xpose.msra.mxu0 0.0
    %601 = vmatprep.subr.mxu0 0.0
    %602 = vmatpush1.xpose.msra.mxu0 0.0
    %603 = vmatprep.subr.mxu0 0.0
    %604 = vmatpush1.xpose.msra.mxu0 0.0
    %605 = vmatprep.subr.mxu0 0.0
    %606 = vmatpush1.xpose.msra.mxu0 0.0
    %607 = vmatprep.subr.mxu0 0.0
    %608 = vmatpush1.xpose.msra.mxu0 0.0
    %609 = vmatprep.subr.mxu0 0.0
    %610 = vmatpush1.xpose.msra.mxu0 0.0
    %611 = vmatprep.subr.mxu0 0.0
    %612 = vmatpush1.xpose.msra.mxu0 0.0
    %613 = vmatprep.subr.mxu0 0.0
    %614 = vmatpush1.xpose.msra.mxu0 0.0
    %615 = vmatprep.subr.mxu0 0.0
    %616 = vmatpush1.xpose.msra.mxu0 0.0
    %617 = vmatprep.subr.mxu0 0.0
    %618 = vmatpush1.xpose.msra.mxu0 0.0
    %619 = vmatprep.subr.mxu0 0.0
    %620 = vmatpush1.xpose.msra.mxu0 0.0
    %621 = vmatprep.subr.mxu0 0.0
    %622 = vmatpush1.xpose.msra.mxu0 0.0
    %623 = vmatprep.subr.mxu0 0.0
    %624 = vmatpush1.xpose.msra.mxu0 0.0
    %625 = vmatprep.subr.mxu0 0.0
    %626 = vmatpush1.xpose.msra.mxu0 0.0
    %627 = vmatprep.subr.mxu0 0.0
    %628 = vmatpush1.xpose.msra.mxu0 0.0
    %629 = vmatprep.subr.mxu0 0.0
    %630 = vmatpush1.xpose.msra.mxu0 0.0
    %631 = vmatprep.subr.mxu0 0.0
    %632 = vmatpush1.xpose.msra.mxu0 0.0
    %633 = vmatprep.subr.mxu0 0.0
    %634 = vmatpush1.xpose.msra.mxu0 0.0
    %635 = vmatprep.mubr.f32.mxu0 0.0
    %636 = vmatmul.mubr.f32.gmra.mrb[0].mxu0 %v567
    %v637 = vpop.f32.mrb[0].mxu0
    %v638 = vadd.f32 %v151, %v637
    %v639 = vpop.f32.mrb[0].mxu0
    %640 = vdwg.mxu0
    %v641 = vsel %vm157, %v560, -inf
    %642 = vmax.xlane.f32.xlu0 %v641
    %v643 = vpop.xlane.xlu0 %642
    %v644 = vsel %vm157, %v638, -inf
    %645 = vmax.xlane.f32.xlu0 %v644
    %v646 = vpop.xlane.xlu0 %645
    %v647 = vsub.f32 %v560, %v643
    %v648 = vsub.f32 %v638, %v646
    %v649 = vmul.f32 %v647, 1.442695
    %v650 = vpow.pop %v649
    %v651 = vmul.f32 %v648, 1.442695
    %v652 = vpow.pop %v651
    %v653 = vsel %vm157, %v650, 0.0
    %654 = vadd.xlane.f32.xlu0 %v653
    %v655 = vpop.xlane.xlu0 %654
    %v656 = vsel %vm157, %v652, 0.0
    %657 = vadd.xlane.f32.xlu0 %v656
    %v658 = vpop.xlane.xlu0 %657
    %v659 = vrcp.pop %v655
    %v660 = vrcp.pop %v658
    %v661 = vmul.f32 %v650, %v659
    %v662 = vmul.f32 %v652, %v660
    %663 = vrot.lane.b32.xlu0 %v128, 56
    %v664 = vpop.permute.xlu0 %663
    %v667 = vsel %vm157, %v661, 0
    %669 = vmatprep.subr.mxu0 0.0
    %670 = vmatpush1.msra.mxu0 %v664
    %671 = vmatprep.subr.mxu0 0.0
    %672 = vmatpush1.msra.mxu0 0.0
    %673 = vmatprep.subr.mxu0 0.0
    %674 = vmatpush1.msra.mxu0 0.0
    %675 = vmatprep.subr.mxu0 0.0
    %676 = vmatpush1.msra.mxu0 0.0
    %677 = vmatprep.subr.mxu0 0.0
    %678 = vmatpush1.msra.mxu0 0.0
    %679 = vmatprep.subr.mxu0 0.0
    %680 = vmatpush1.msra.mxu0 0.0
    %681 = vmatprep.subr.mxu0 0.0
    %682 = vmatpush1.msra.mxu0 0.0
    %683 = vmatprep.subr.mxu0 0.0
    %684 = vmatpush1.msra.mxu0 0.0
    %685 = vmatprep.subr.mxu0 0.0
    %686 = vmatpush1.msra.mxu0 0.0
    %687 = vmatprep.subr.mxu0 0.0
    %688 = vmatpush1.msra.mxu0 0.0
    %689 = vmatprep.subr.mxu0 0.0
    %690 = vmatpush1.msra.mxu0 0.0
    %691 = vmatprep.subr.mxu0 0.0
    %692 = vmatpush1.msra.mxu0 0.0
    %693 = vmatprep.subr.mxu0 0.0
    %694 = vmatpush1.msra.mxu0 0.0
    %695 = vmatprep.subr.mxu0 0.0
    %696 = vmatpush1.msra.mxu0 0.0
    %697 = vmatprep.subr.mxu0 0.0
    %698 = vmatpush1.msra.mxu0 0.0
    %699 = vmatprep.subr.mxu0 0.0
    %700 = vmatpush1.msra.mxu0 0.0
    %701 = vmatprep.subr.mxu0 0.0
    %702 = vmatpush1.msra.mxu0 0.0
    %703 = vmatprep.subr.mxu0 0.0
    %704 = vmatpush1.msra.mxu0 0.0
    %705 = vmatprep.subr.mxu0 0.0
    %706 = vmatpush1.msra.mxu0 0.0
    %707 = vmatprep.subr.mxu0 0.0
    %708 = vmatpush1.msra.mxu0 0.0
    %709 = vmatprep.subr.mxu0 0.0
    %710 = vmatpush1.msra.mxu0 0.0
    %711 = vmatprep.subr.mxu0 0.0
    %712 = vmatpush1.msra.mxu0 0.0
    %713 = vmatprep.subr.mxu0 0.0
    %714 = vmatpush1.msra.mxu0 0.0
    %715 = vmatprep.subr.mxu0 0.0
    %716 = vmatpush1.msra.mxu0 0.0
    %717 = vmatprep.subr.mxu0 0.0
    %718 = vmatpush1.msra.mxu0 0.0
    %719 = vmatprep.subr.mxu0 0.0
    %720 = vmatpush1.msra.mxu0 0.0
    %721 = vmatprep.subr.mxu0 0.0
    %722 = vmatpush1.msra.mxu0 0.0
    %723 = vmatprep.subr.mxu0 0.0
    %724 = vmatpush1.msra.mxu0 0.0
    %725 = vmatprep.subr.mxu0 0.0
    %726 = vmatpush1.msra.mxu0 0.0
    %727 = vmatprep.subr.mxu0 0.0
    %728 = vmatpush1.msra.mxu0 0.0
    %729 = vmatprep.subr.mxu0 0.0
    %730 = vmatpush1.msra.mxu0 0.0
    %731 = vmatprep.subr.mxu0 0.0
    %732 = vmatpush1.msra.mxu0 0.0
    %733 = vmatprep.mubr.f32.mxu0 0.0
    %734 = vmatmul.mubr.f32.gmra.mrb[0].mxu0 %v667
    %v735 = vpop.f32.mrb[0].mxu0
    %v736 = vadd.f32 0.0, %v735
    %v737 = vpop.f32.mrb[0].mxu0
    %738 = vdwg.mxu0
    %739 = vrot.lane.b32.xlu0 %v133, 56
    %v740 = vpop.permute.xlu0 %739
    %v743 = vsel %vm157, %v662, 0
    %745 = vmatprep.subr.mxu0 0.0
    %746 = vmatpush1.msra.mxu0 %v740
    %747 = vmatprep.subr.mxu0 0.0
    %748 = vmatpush1.msra.mxu0 0.0
    %749 = vmatprep.subr.mxu0 0.0
    %750 = vmatpush1.msra.mxu0 0.0
    %751 = vmatprep.subr.mxu0 0.0
    %752 = vmatpush1.msra.mxu0 0.0
    %753 = vmatprep.subr.mxu0 0.0
    %754 = vmatpush1.msra.mxu0 0.0
    %755 = vmatprep.subr.mxu0 0.0
    %756 = vmatpush1.msra.mxu0 0.0
    %757 = vmatprep.subr.mxu0 0.0
    %758 = vmatpush1.msra.mxu0 0.0
    %759 = vmatprep.subr.mxu0 0.0
    %760 = vmatpush1.msra.mxu0 0.0
    %761 = vmatprep.subr.mxu0 0.0
    %762 = vmatpush1.msra.mxu0 0.0
    %763 = vmatprep.subr.mxu0 0.0
    %764 = vmatpush1.msra.mxu0 0.0
    %765 = vmatprep.subr.mxu0 0.0
    %766 = vmatpush1.msra.mxu0 0.0
    %767 = vmatprep.subr.mxu0 0.0
    %768 = vmatpush1.msra.mxu0 0.0
    %769 = vmatprep.subr.mxu0 0.0
    %770 = vmatpush1.msra.mxu0 0.0
    %771 = vmatprep.subr.mxu0 0.0
    %772 = vmatpush1.msra.mxu0 0.0
    %773 = vmatprep.subr.mxu0 0.0
    %774 = vmatpush1.msra.mxu0 0.0
    %775 = vmatprep.subr.mxu0 0.0
    %776 = vmatpush1.msra.mxu0 0.0
    %777 = vmatprep.subr.mxu0 0.0
    %778 = vmatpush1.msra.mxu0 0.0
    %779 = vmatprep.subr.mxu0 0.0
    %780 = vmatpush1.msra.mxu0 0.0
    %781 = vmatprep.subr.mxu0 0.0
    %782 = vmatpush1.msra.mxu0 0.0
    %783 = vmatprep.subr.mxu0 0.0
    %784 = vmatpush1.msra.mxu0 0.0
    %785 = vmatprep.subr.mxu0 0.0
    %786 = vmatpush1.msra.mxu0 0.0
    %787 = vmatprep.subr.mxu0 0.0
    %788 = vmatpush1.msra.mxu0 0.0
    %789 = vmatprep.subr.mxu0 0.0
    %790 = vmatpush1.msra.mxu0 0.0
    %791 = vmatprep.subr.mxu0 0.0
    %792 = vmatpush1.msra.mxu0 0.0
    %793 = vmatprep.subr.mxu0 0.0
    %794 = vmatpush1.msra.mxu0 0.0
    %795 = vmatprep.subr.mxu0 0.0
    %796 = vmatpush1.msra.mxu0 0.0
    %797 = vmatprep.subr.mxu0 0.0
    %798 = vmatpush1.msra.mxu0 0.0
    %799 = vmatprep.subr.mxu0 0.0
    %800 = vmatpush1.msra.mxu0 0.0
    %801 = vmatprep.subr.mxu0 0.0
    %802 = vmatpush1.msra.mxu0 0.0
    %803 = vmatprep.subr.mxu0 0.0
    %804 = vmatpush1.msra.mxu0 0.0
    %805 = vmatprep.subr.mxu0 0.0
    %806 = vmatpush1.msra.mxu0 0.0
    %807 = vmatprep.subr.mxu0 0.0
    %808 = vmatpush1.msra.mxu0 0.0
    %809 = vmatprep.mubr.f32.mxu0 0.0
    %810 = vmatmul.mubr.f32.gmra.mrb[0].mxu0 %v743
    %v811 = vpop.f32.mrb[0].mxu0
    %v812 = vadd.f32 0.0, %v811
    %v813 = vpop.f32.mrb[0].mxu0
    %814 = vdwg.mxu0
    %v816 = vsel %vm157, %v736, 0
    %v819 = vsel %vm157, %v812, 0
    %821 = vmatprep.subr.mxu0 0.0
    %822 = vmatpush1.msra.mxu0 %v139
    %823 = vmatprep.subr.mxu0 0.0
    %824 = vmatpush1.msra.mxu0 0.0
    %825 = vmatprep.subr.mxu0 0.0
    %826 = vmatpush1.msra.mxu0 0.0
    %827 = vmatprep.subr.mxu0 0.0
    %828 = vmatpush1.msra.mxu0 0.0
    %829 = vmatprep.subr.mxu0 0.0
    %830 = vmatpush1.msra.mxu0 0.0
    %831 = vmatprep.subr.mxu0 0.0
    %832 = vmatpush1.msra.mxu0 0.0
    %833 = vmatprep.subr.mxu0 0.0
    %834 = vmatpush1.msra.mxu0 0.0
    %835 = vmatprep.subr.mxu0 0.0
    %836 = vmatpush1.msra.mxu0 0.0
    %837 = vmatprep.subr.mxu0 0.0
    %838 = vmatpush1.msra.mxu0 0.0
    %839 = vmatprep.subr.mxu0 0.0
    %840 = vmatpush1.msra.mxu0 0.0
    %841 = vmatprep.subr.mxu0 0.0
    %842 = vmatpush1.msra.mxu0 0.0
    %843 = vmatprep.subr.mxu0 0.0
    %844 = vmatpush1.msra.mxu0 0.0
    %845 = vmatprep.subr.mxu0 0.0
    %846 = vmatpush1.msra.mxu0 0.0
    %847 = vmatprep.subr.mxu0 0.0
    %848 = vmatpush1.msra.mxu0 0.0
    %849 = vmatprep.subr.mxu0 0.0
    %850 = vmatpush1.msra.mxu0 0.0
    %851 = vmatprep.subr.mxu0 0.0
    %852 = vmatpush1.msra.mxu0 0.0
    %853 = vmatprep.subr.mxu0 0.0
    %854 = vmatpush1.msra.mxu0 0.0
    %855 = vmatprep.subr.mxu0 0.0
    %856 = vmatpush1.msra.mxu0 0.0
    %857 = vmatprep.subr.mxu0 0.0
    %858 = vmatpush1.msra.mxu0 0.0
    %859 = vmatprep.subr.mxu0 0.0
    %860 = vmatpush1.msra.mxu0 0.0
    %861 = vmatprep.subr.mxu0 0.0
    %862 = vmatpush1.msra.mxu0 0.0
    %863 = vmatprep.subr.mxu0 0.0
    %864 = vmatpush1.msra.mxu0 0.0
    %865 = vmatprep.subr.mxu0 0.0
    %866 = vmatpush1.msra.mxu0 0.0
    %867 = vmatprep.subr.mxu0 0.0
    %868 = vmatpush1.msra.mxu0 0.0
    %869 = vmatprep.subr.mxu0 0.0
    %870 = vmatpush1.msra.mxu0 0.0
    %871 = vmatprep.subr.mxu0 0.0
    %872 = vmatpush1.msra.mxu0 0.0
    %873 = vmatprep.subr.mxu0 0.0
    %874 = vmatpush1.msra.mxu0 0.0
    %875 = vmatprep.subr.mxu0 0.0
    %876 = vmatpush1.msra.mxu0 0.0
    %877 = vmatprep.subr.mxu0 0.0
    %878 = vmatpush1.msra.mxu0 0.0
    %879 = vmatprep.subr.mxu0 0.0
    %880 = vmatpush1.msra.mxu0 0.0
    %881 = vmatprep.subr.mxu0 0.0
    %882 = vmatpush1.msra.mxu0 0.0
    %883 = vmatprep.subr.mxu0 0.0
    %884 = vmatpush1.msra.mxu0 0.0
    %885 = vmatprep.mubr.f32.mxu0 0.0
    %886 = vmatmul.mubr.f32.gmra.mrb[0].mxu0 %v816
    %v887 = vpop.f32.mrb[0].mxu0
    %v888 = vadd.f32 0.0, %v887
    %v889 = vpop.f32.mrb[0].mxu0
    %890 = vmatprep.mubr.f32.mxu0 0.0
    %891 = vmatmul.mubr.f32.gmra.mrb[0].mxu0 %v819
    %v892 = vpop.f32.mrb[0].mxu0
    %v893 = vadd.f32 0.0, %v892
    %v894 = vpop.f32.mrb[0].mxu0
    %895 = vdwg.mxu0
    %v897 = vsel %vm157, %v406, 0
    %v900 = vsel %vm157, %v482, 0
    %902 = vmatprep.subr.mxu0 0.0
    %903 = vmatpush1.msra.mxu0 %v138
    %904 = vmatprep.subr.mxu0 0.0
    %905 = vmatpush1.msra.mxu0 0.0
    %906 = vmatprep.subr.mxu0 0.0
    %907 = vmatpush1.msra.mxu0 0.0
    %908 = vmatprep.subr.mxu0 0.0
    %909 = vmatpush1.msra.mxu0 0.0
    %910 = vmatprep.subr.mxu0 0.0
    %911 = vmatpush1.msra.mxu0 0.0
    %912 = vmatprep.subr.mxu0 0.0
    %913 = vmatpush1.msra.mxu0 0.0
    %914 = vmatprep.subr.mxu0 0.0
    %915 = vmatpush1.msra.mxu0 0.0
    %916 = vmatprep.subr.mxu0 0.0
    %917 = vmatpush1.msra.mxu0 0.0
    %918 = vmatprep.subr.mxu0 0.0
    %919 = vmatpush1.msra.mxu0 0.0
    %920 = vmatprep.subr.mxu0 0.0
    %921 = vmatpush1.msra.mxu0 0.0
    %922 = vmatprep.subr.mxu0 0.0
    %923 = vmatpush1.msra.mxu0 0.0
    %924 = vmatprep.subr.mxu0 0.0
    %925 = vmatpush1.msra.mxu0 0.0
    %926 = vmatprep.subr.mxu0 0.0
    %927 = vmatpush1.msra.mxu0 0.0
    %928 = vmatprep.subr.mxu0 0.0
    %929 = vmatpush1.msra.mxu0 0.0
    %930 = vmatprep.subr.mxu0 0.0
    %931 = vmatpush1.msra.mxu0 0.0
    %932 = vmatprep.subr.mxu0 0.0
    %933 = vmatpush1.msra.mxu0 0.0
    %934 = vmatprep.subr.mxu0 0.0
    %935 = vmatpush1.msra.mxu0 0.0
    %936 = vmatprep.subr.mxu0 0.0
    %937 = vmatpush1.msra.mxu0 0.0
    %938 = vmatprep.subr.mxu0 0.0
    %939 = vmatpush1.msra.mxu0 0.0
    %940 = vmatprep.subr.mxu0 0.0
    %941 = vmatpush1.msra.mxu0 0.0
    %942 = vmatprep.subr.mxu0 0.0
    %943 = vmatpush1.msra.mxu0 0.0
    %944 = vmatprep.subr.mxu0 0.0
    %945 = vmatpush1.msra.mxu0 0.0
    %946 = vmatprep.subr.mxu0 0.0
    %947 = vmatpush1.msra.mxu0 0.0
    %948 = vmatprep.subr.mxu0 0.0
    %949 = vmatpush1.msra.mxu0 0.0
    %950 = vmatprep.subr.mxu0 0.0
    %951 = vmatpush1.msra.mxu0 0.0
    %952 = vmatprep.subr.mxu0 0.0
    %953 = vmatpush1.msra.mxu0 0.0
    %954 = vmatprep.subr.mxu0 0.0
    %955 = vmatpush1.msra.mxu0 0.0
    %956 = vmatprep.subr.mxu0 0.0
    %957 = vmatpush1.msra.mxu0 0.0
    %958 = vmatprep.subr.mxu0 0.0
    %959 = vmatpush1.msra.mxu0 0.0
    %960 = vmatprep.subr.mxu0 0.0
    %961 = vmatpush1.msra.mxu0 0.0
    %962 = vmatprep.subr.mxu0 0.0
    %963 = vmatpush1.msra.mxu0 0.0
    %964 = vmatprep.subr.mxu0 0.0
    %965 = vmatpush1.msra.mxu0 0.0
    %966 = vmatprep.mubr.f32.mxu0 0.0
    %967 = vmatmul.mubr.f32.gmra.mrb[0].mxu0 %v897
    %v968 = vpop.f32.mrb[0].mxu0
    %v969 = vadd.f32 %v888, %v968
    %v970 = vpop.f32.mrb[0].mxu0
    %971 = vmatprep.mubr.f32.mxu0 0.0
    %972 = vmatmul.mubr.f32.gmra.mrb[0].mxu0 %v900
    %v973 = vpop.f32.mrb[0].mxu0
    %v974 = vadd.f32 %v893, %v973
    %v975 = vpop.f32.mrb[0].mxu0
    %976 = vdwg.mxu0
    %977 = vrot.lane.b32.xlu0 %v136, 112
    %v978 = vpop.permute.xlu0 %977
    %979 = vrot.lane.b32.xlu0 %v128, 80
    %v980 = vpop.permute.xlu0 %979
    %v981 = vsel %vm157, %v978, 0
    %v983 = vsel %vm157, %v980, 0
    %985 = vmatprep.subr.mxu0 0.0
    %986 = vmatpush1.xpose.msra.mxu0 %v983
    %987 = vmatprep.subr.mxu0 0.0
    %988 = vmatpush1.xpose.msra.mxu0 0.0
    %989 = vmatprep.subr.mxu0 0.0
    %990 = vmatpush1.xpose.msra.mxu0 0.0
    %991 = vmatprep.subr.mxu0 0.0
    %992 = vmatpush1.xpose.msra.mxu0 0.0
    %993 = vmatprep.subr.mxu0 0.0
    %994 = vmatpush1.xpose.msra.mxu0 0.0
    %995 = vmatprep.subr.mxu0 0.0
    %996 = vmatpush1.xpose.msra.mxu0 0.0
    %997 = vmatprep.subr.mxu0 0.0
    %998 = vmatpush1.xpose.msra.mxu0 0.0
    %999 = vmatprep.subr.mxu0 0.0
    %1000 = vmatpush1.xpose.msra.mxu0 0.0
    %1001 = vmatprep.subr.mxu0 0.0
    %1002 = vmatpush1.xpose.msra.mxu0 0.0
    %1003 = vmatprep.subr.mxu0 0.0
    %1004 = vmatpush1.xpose.msra.mxu0 0.0
    %1005 = vmatprep.subr.mxu0 0.0
    %1006 = vmatpush1.xpose.msra.mxu0 0.0
    %1007 = vmatprep.subr.mxu0 0.0
    %1008 = vmatpush1.xpose.msra.mxu0 0.0
    %1009 = vmatprep.subr.mxu0 0.0
    %1010 = vmatpush1.xpose.msra.mxu0 0.0
    %1011 = vmatprep.subr.mxu0 0.0
    %1012 = vmatpush1.xpose.msra.mxu0 0.0
    %1013 = vmatprep.subr.mxu0 0.0
    %1014 = vmatpush1.xpose.msra.mxu0 0.0
    %1015 = vmatprep.subr.mxu0 0.0
    %1016 = vmatpush1.xpose.msra.mxu0 0.0
    %1017 = vmatprep.subr.mxu0 0.0
    %1018 = vmatpush1.xpose.msra.mxu0 0.0
    %1019 = vmatprep.subr.mxu0 0.0
    %1020 = vmatpush1.xpose.msra.mxu0 0.0
    %1021 = vmatprep.subr.mxu0 0.0
    %1022 = vmatpush1.xpose.msra.mxu0 0.0
    %1023 = vmatprep.subr.mxu0 0.0
    %1024 = vmatpush1.xpose.msra.mxu0 0.0
    %1025 = vmatprep.subr.mxu0 0.0
    %1026 = vmatpush1.xpose.msra.mxu0 0.0
    %1027 = vmatprep.subr.mxu0 0.0
    %1028 = vmatpush1.xpose.msra.mxu0 0.0
    %1029 = vmatprep.subr.mxu0 0.0
    %1030 = vmatpush1.xpose.msra.mxu0 0.0
    %1031 = vmatprep.subr.mxu0 0.0
    %1032 = vmatpush1.xpose.msra.mxu0 0.0
    %1033 = vmatprep.subr.mxu0 0.0
    %1034 = vmatpush1.xpose.msra.mxu0 0.0
    %1035 = vmatprep.subr.mxu0 0.0
    %1036 = vmatpush1.xpose.msra.mxu0 0.0
    %1037 = vmatprep.subr.mxu0 0.0
    %1038 = vmatpush1.xpose.msra.mxu0 0.0
    %1039 = vmatprep.subr.mxu0 0.0
    %1040 = vmatpush1.xpose.msra.mxu0 0.0
    %1041 = vmatprep.subr.mxu0 0.0
    %1042 = vmatpush1.xpose.msra.mxu0 0.0
    %1043 = vmatprep.subr.mxu0 0.0
    %1044 = vmatpush1.xpose.msra.mxu0 0.0
    %1045 = vmatprep.subr.mxu0 0.0
    %1046 = vmatpush1.xpose.msra.mxu0 0.0
    %1047 = vmatprep.subr.mxu0 0.0
    %1048 = vmatpush1.xpose.msra.mxu0 0.0
    %1049 = vmatprep.mubr.f32.mxu0 0.0
    %1050 = vmatmul.mubr.f32.gmra.mrb[0].mxu0 %v981
    %v1051 = vpop.f32.mrb[0].mxu0
    %v1052 = vadd.f32 %v147, %v1051
    %v1053 = vpop.f32.mrb[0].mxu0
    %1054 = vdwg.mxu0
    %1055 = vrot.lane.b32.xlu0 %v137, 112
    %v1056 = vpop.permute.xlu0 %1055
    %1057 = vrot.lane.b32.xlu0 %v133, 80
    %v1058 = vpop.permute.xlu0 %1057
    %v1059 = vsel %vm157, %v1056, 0
    %v1061 = vsel %vm157, %v1058, 0
    %1063 = vmatprep.subr.mxu0 0.0
    %1064 = vmatpush1.xpose.msra.mxu0 %v1061
    %1065 = vmatprep.subr.mxu0 0.0
    %1066 = vmatpush1.xpose.msra.mxu0 0.0
    %1067 = vmatprep.subr.mxu0 0.0
    %1068 = vmatpush1.xpose.msra.mxu0 0.0
    %1069 = vmatprep.subr.mxu0 0.0
    %1070 = vmatpush1.xpose.msra.mxu0 0.0
    %1071 = vmatprep.subr.mxu0 0.0
    %1072 = vmatpush1.xpose.msra.mxu0 0.0
    %1073 = vmatprep.subr.mxu0 0.0
    %1074 = vmatpush1.xpose.msra.mxu0 0.0
    %1075 = vmatprep.subr.mxu0 0.0
    %1076 = vmatpush1.xpose.msra.mxu0 0.0
    %1077 = vmatprep.subr.mxu0 0.0
    %1078 = vmatpush1.xpose.msra.mxu0 0.0
    %1079 = vmatprep.subr.mxu0 0.0
    %1080 = vmatpush1.xpose.msra.mxu0 0.0
    %1081 = vmatprep.subr.mxu0 0.0
    %1082 = vmatpush1.xpose.msra.mxu0 0.0
    %1083 = vmatprep.subr.mxu0 0.0
    %1084 = vmatpush1.xpose.msra.mxu0 0.0
    %1085 = vmatprep.subr.mxu0 0.0
    %1086 = vmatpush1.xpose.msra.mxu0 0.0
    %1087 = vmatprep.subr.mxu0 0.0
    %1088 = vmatpush1.xpose.msra.mxu0 0.0
    %1089 = vmatprep.subr.mxu0 0.0
    %1090 = vmatpush1.xpose.msra.mxu0 0.0
    %1091 = vmatprep.subr.mxu0 0.0
    %1092 = vmatpush1.xpose.msra.mxu0 0.0
    %1093 = vmatprep.subr.mxu0 0.0
    %1094 = vmatpush1.xpose.msra.mxu0 0.0
    %1095 = vmatprep.subr.mxu0 0.0
    %1096 = vmatpush1.xpose.msra.mxu0 0.0
    %1097 = vmatprep.subr.mxu0 0.0
    %1098 = vmatpush1.xpose.msra.mxu0 0.0
    %1099 = vmatprep.subr.mxu0 0.0
    %1100 = vmatpush1.xpose.msra.mxu0 0.0
    %1101 = vmatprep.subr.mxu0 0.0
    %1102 = vmatpush1.xpose.msra.mxu0 0.0
    %1103 = vmatprep.subr.mxu0 0.0
    %1104 = vmatpush1.xpose.msra.mxu0 0.0
    %1105 = vmatprep.subr.mxu0 0.0
    %1106 = vmatpush1.xpose.msra.mxu0 0.0
    %1107 = vmatprep.subr.mxu0 0.0
    %1108 = vmatpush1.xpose.msra.mxu0 0.0
    %1109 = vmatprep.subr.mxu0 0.0
    %1110 = vmatpush1.xpose.msra.mxu0 0.0
    %1111 = vmatprep.subr.mxu0 0.0
    %1112 = vmatpush1.xpose.msra.mxu0 0.0
    %1113 = vmatprep.subr.mxu0 0.0
    %1114 = vmatpush1.xpose.msra.mxu0 0.0
    %1115 = vmatprep.subr.mxu0 0.0
    %1116 = vmatpush1.xpose.msra.mxu0 0.0
    %1117 = vmatprep.subr.mxu0 0.0
    %1118 = vmatpush1.xpose.msra.mxu0 0.0
    %1119 = vmatprep.subr.mxu0 0.0
    %1120 = vmatpush1.xpose.msra.mxu0 0.0
    %1121 = vmatprep.subr.mxu0 0.0
    %1122 = vmatpush1.xpose.msra.mxu0 0.0
    %1123 = vmatprep.subr.mxu0 0.0
    %1124 = vmatpush1.xpose.msra.mxu0 0.0
    %1125 = vmatprep.subr.mxu0 0.0
    %1126 = vmatpush1.xpose.msra.mxu0 0.0
    %1127 = vmatprep.mubr.f32.mxu0 0.0
    %1128 = vmatmul.mubr.f32.gmra.mrb[0].mxu0 %v1059
    %v1129 = vpop.f32.mrb[0].mxu0
    %v1130 = vadd.f32 %v151, %v1129
    %v1131 = vpop.f32.mrb[0].mxu0
    %1132 = vdwg.mxu0
    %v1133 = vsel %vm157, %v1052, -inf
    %1134 = vmax.xlane.f32.xlu0 %v1133
    %v1135 = vpop.xlane.xlu0 %1134
    %v1136 = vsel %vm157, %v1130, -inf
    %1137 = vmax.xlane.f32.xlu0 %v1136
    %v1138 = vpop.xlane.xlu0 %1137
    %v1139 = vsub.f32 %v1052, %v1135
    %v1140 = vsub.f32 %v1130, %v1138
    %v1141 = vmul.f32 %v1139, 1.442695
    %v1142 = vpow.pop %v1141
    %v1143 = vmul.f32 %v1140, 1.442695
    %v1144 = vpow.pop %v1143
    %v1145 = vsel %vm157, %v1142, 0.0
    %1146 = vadd.xlane.f32.xlu0 %v1145
    %v1147 = vpop.xlane.xlu0 %1146
    %v1148 = vsel %vm157, %v1144, 0.0
    %1149 = vadd.xlane.f32.xlu0 %v1148
    %v1150 = vpop.xlane.xlu0 %1149
    %v1151 = vrcp.pop %v1147
    %v1152 = vrcp.pop %v1150
    %v1153 = vmul.f32 %v1142, %v1151
    %v1154 = vmul.f32 %v1144, %v1152
    %1155 = vrot.lane.b32.xlu0 %v128, 48
    %v1156 = vpop.permute.xlu0 %1155
    %v1159 = vsel %vm157, %v1153, 0
    %1161 = vmatprep.subr.mxu0 0.0
    %1162 = vmatpush1.msra.mxu0 %v1156
    %1163 = vmatprep.subr.mxu0 0.0
    %1164 = vmatpush1.msra.mxu0 0.0
    %1165 = vmatprep.subr.mxu0 0.0
    %1166 = vmatpush1.msra.mxu0 0.0
    %1167 = vmatprep.subr.mxu0 0.0
    %1168 = vmatpush1.msra.mxu0 0.0
    %1169 = vmatprep.subr.mxu0 0.0
    %1170 = vmatpush1.msra.mxu0 0.0
    %1171 = vmatprep.subr.mxu0 0.0
    %1172 = vmatpush1.msra.mxu0 0.0
    %1173 = vmatprep.subr.mxu0 0.0
    %1174 = vmatpush1.msra.mxu0 0.0
    %1175 = vmatprep.subr.mxu0 0.0
    %1176 = vmatpush1.msra.mxu0 0.0
    %1177 = vmatprep.subr.mxu0 0.0
    %1178 = vmatpush1.msra.mxu0 0.0
    %1179 = vmatprep.subr.mxu0 0.0
    %1180 = vmatpush1.msra.mxu0 0.0
    %1181 = vmatprep.subr.mxu0 0.0
    %1182 = vmatpush1.msra.mxu0 0.0
    %1183 = vmatprep.subr.mxu0 0.0
    %1184 = vmatpush1.msra.mxu0 0.0
    %1185 = vmatprep.subr.mxu0 0.0
    %1186 = vmatpush1.msra.mxu0 0.0
    %1187 = vmatprep.subr.mxu0 0.0
    %1188 = vmatpush1.msra.mxu0 0.0
    %1189 = vmatprep.subr.mxu0 0.0
    %1190 = vmatpush1.msra.mxu0 0.0
    %1191 = vmatprep.subr.mxu0 0.0
    %1192 = vmatpush1.msra.mxu0 0.0
    %1193 = vmatprep.subr.mxu0 0.0
    %1194 = vmatpush1.msra.mxu0 0.0
    %1195 = vmatprep.subr.mxu0 0.0
    %1196 = vmatpush1.msra.mxu0 0.0
    %1197 = vmatprep.subr.mxu0 0.0
    %1198 = vmatpush1.msra.mxu0 0.0
    %1199 = vmatprep.subr.mxu0 0.0
    %1200 = vmatpush1.msra.mxu0 0.0
    %1201 = vmatprep.subr.mxu0 0.0
    %1202 = vmatpush1.msra.mxu0 0.0
    %1203 = vmatprep.subr.mxu0 0.0
    %1204 = vmatpush1.msra.mxu0 0.0
    %1205 = vmatprep.subr.mxu0 0.0
    %1206 = vmatpush1.msra.mxu0 0.0
    %1207 = vmatprep.subr.mxu0 0.0
    %1208 = vmatpush1.msra.mxu0 0.0
    %1209 = vmatprep.subr.mxu0 0.0
    %1210 = vmatpush1.msra.mxu0 0.0
    %1211 = vmatprep.subr.mxu0 0.0
    %1212 = vmatpush1.msra.mxu0 0.0
    %1213 = vmatprep.subr.mxu0 0.0
    %1214 = vmatpush1.msra.mxu0 0.0
    %1215 = vmatprep.subr.mxu0 0.0
    %1216 = vmatpush1.msra.mxu0 0.0
    %1217 = vmatprep.subr.mxu0 0.0
    %1218 = vmatpush1.msra.mxu0 0.0
    %1219 = vmatprep.subr.mxu0 0.0
    %1220 = vmatpush1.msra.mxu0 0.0
    %1221 = vmatprep.subr.mxu0 0.0
    %1222 = vmatpush1.msra.mxu0 0.0
    %1223 = vmatprep.subr.mxu0 0.0
    %1224 = vmatpush1.msra.mxu0 0.0
    %1225 = vmatprep.mubr.f32.mxu0 0.0
    %1226 = vmatmul.mubr.f32.gmra.mrb[0].mxu0 %v1159
    %v1227 = vpop.f32.mrb[0].mxu0
    %v1228 = vadd.f32 0.0, %v1227
    %v1229 = vpop.f32.mrb[0].mxu0
    %1230 = vdwg.mxu0
    %1231 = vrot.lane.b32.xlu0 %v133, 48
    %v1232 = vpop.permute.xlu0 %1231
    %v1235 = vsel %vm157, %v1154, 0
    %1237 = vmatprep.subr.mxu0 0.0
    %1238 = vmatpush1.msra.mxu0 %v1232
    %1239 = vmatprep.subr.mxu0 0.0
    %1240 = vmatpush1.msra.mxu0 0.0
    %1241 = vmatprep.subr.mxu0 0.0
    %1242 = vmatpush1.msra.mxu0 0.0
    %1243 = vmatprep.subr.mxu0 0.0
    %1244 = vmatpush1.msra.mxu0 0.0
    %1245 = vmatprep.subr.mxu0 0.0
    %1246 = vmatpush1.msra.mxu0 0.0
    %1247 = vmatprep.subr.mxu0 0.0
    %1248 = vmatpush1.msra.mxu0 0.0
    %1249 = vmatprep.subr.mxu0 0.0
    %1250 = vmatpush1.msra.mxu0 0.0
    %1251 = vmatprep.subr.mxu0 0.0
    %1252 = vmatpush1.msra.mxu0 0.0
    %1253 = vmatprep.subr.mxu0 0.0
    %1254 = vmatpush1.msra.mxu0 0.0
    %1255 = vmatprep.subr.mxu0 0.0
    %1256 = vmatpush1.msra.mxu0 0.0
    %1257 = vmatprep.subr.mxu0 0.0
    %1258 = vmatpush1.msra.mxu0 0.0
    %1259 = vmatprep.subr.mxu0 0.0
    %1260 = vmatpush1.msra.mxu0 0.0
    %1261 = vmatprep.subr.mxu0 0.0
    %1262 = vmatpush1.msra.mxu0 0.0
    %1263 = vmatprep.subr.mxu0 0.0
    %1264 = vmatpush1.msra.mxu0 0.0
    %1265 = vmatprep.subr.mxu0 0.0
    %1266 = vmatpush1.msra.mxu0 0.0
    %1267 = vmatprep.subr.mxu0 0.0
    %1268 = vmatpush1.msra.mxu0 0.0
    %1269 = vmatprep.subr.mxu0 0.0
    %1270 = vmatpush1.msra.mxu0 0.0
    %1271 = vmatprep.subr.mxu0 0.0
    %1272 = vmatpush1.msra.mxu0 0.0
    %1273 = vmatprep.subr.mxu0 0.0
    %1274 = vmatpush1.msra.mxu0 0.0
    %1275 = vmatprep.subr.mxu0 0.0
    %1276 = vmatpush1.msra.mxu0 0.0
    %1277 = vmatprep.subr.mxu0 0.0
    %1278 = vmatpush1.msra.mxu0 0.0
    %1279 = vmatprep.subr.mxu0 0.0
    %1280 = vmatpush1.msra.mxu0 0.0
    %1281 = vmatprep.subr.mxu0 0.0
    %1282 = vmatpush1.msra.mxu0 0.0
    %1283 = vmatprep.subr.mxu0 0.0
    %1284 = vmatpush1.msra.mxu0 0.0
    %1285 = vmatprep.subr.mxu0 0.0
    %1286 = vmatpush1.msra.mxu0 0.0
    %1287 = vmatprep.subr.mxu0 0.0
    %1288 = vmatpush1.msra.mxu0 0.0
    %1289 = vmatprep.subr.mxu0 0.0
    %1290 = vmatpush1.msra.mxu0 0.0
    %1291 = vmatprep.subr.mxu0 0.0
    %1292 = vmatpush1.msra.mxu0 0.0
    %1293 = vmatprep.subr.mxu0 0.0
    %1294 = vmatpush1.msra.mxu0 0.0
    %1295 = vmatprep.subr.mxu0 0.0
    %1296 = vmatpush1.msra.mxu0 0.0
    %1297 = vmatprep.subr.mxu0 0.0
    %1298 = vmatpush1.msra.mxu0 0.0
    %1299 = vmatprep.subr.mxu0 0.0
    %1300 = vmatpush1.msra.mxu0 0.0
    %1301 = vmatprep.mubr.f32.mxu0 0.0
    %1302 = vmatmul.mubr.f32.gmra.mrb[0].mxu0 %v1235
    %v1303 = vpop.f32.mrb[0].mxu0
    %v1304 = vadd.f32 0.0, %v1303
    %v1305 = vpop.f32.mrb[0].mxu0
    %1306 = vdwg.mxu0
    %v1308 = vsel %vm157, %v1228, 0
    %v1311 = vsel %vm157, %v1304, 0
    %1313 = vmatprep.subr.mxu0 0.0
    %1314 = vmatpush1.msra.mxu0 %v140
    %1315 = vmatprep.subr.mxu0 0.0
    %1316 = vmatpush1.msra.mxu0 0.0
    %1317 = vmatprep.subr.mxu0 0.0
    %1318 = vmatpush1.msra.mxu0 0.0
    %1319 = vmatprep.subr.mxu0 0.0
    %1320 = vmatpush1.msra.mxu0 0.0
    %1321 = vmatprep.subr.mxu0 0.0
    %1322 = vmatpush1.msra.mxu0 0.0
    %1323 = vmatprep.subr.mxu0 0.0
    %1324 = vmatpush1.msra.mxu0 0.0
    %1325 = vmatprep.subr.mxu0 0.0
    %1326 = vmatpush1.msra.mxu0 0.0
    %1327 = vmatprep.subr.mxu0 0.0
    %1328 = vmatpush1.msra.mxu0 0.0
    %1329 = vmatprep.subr.mxu0 0.0
    %1330 = vmatpush1.msra.mxu0 0.0
    %1331 = vmatprep.subr.mxu0 0.0
    %1332 = vmatpush1.msra.mxu0 0.0
    %1333 = vmatprep.subr.mxu0 0.0
    %1334 = vmatpush1.msra.mxu0 0.0
    %1335 = vmatprep.subr.mxu0 0.0
    %1336 = vmatpush1.msra.mxu0 0.0
    %1337 = vmatprep.subr.mxu0 0.0
    %1338 = vmatpush1.msra.mxu0 0.0
    %1339 = vmatprep.subr.mxu0 0.0
    %1340 = vmatpush1.msra.mxu0 0.0
    %1341 = vmatprep.subr.mxu0 0.0
    %1342 = vmatpush1.msra.mxu0 0.0
    %1343 = vmatprep.subr.mxu0 0.0
    %1344 = vmatpush1.msra.mxu0 0.0
    %1345 = vmatprep.subr.mxu0 0.0
    %1346 = vmatpush1.msra.mxu0 0.0
    %1347 = vmatprep.subr.mxu0 0.0
    %1348 = vmatpush1.msra.mxu0 0.0
    %1349 = vmatprep.subr.mxu0 0.0
    %1350 = vmatpush1.msra.mxu0 0.0
    %1351 = vmatprep.subr.mxu0 0.0
    %1352 = vmatpush1.msra.mxu0 0.0
    %1353 = vmatprep.subr.mxu0 0.0
    %1354 = vmatpush1.msra.mxu0 0.0
    %1355 = vmatprep.subr.mxu0 0.0
    %1356 = vmatpush1.msra.mxu0 0.0
    %1357 = vmatprep.subr.mxu0 0.0
    %1358 = vmatpush1.msra.mxu0 0.0
    %1359 = vmatprep.subr.mxu0 0.0
    %1360 = vmatpush1.msra.mxu0 0.0
    %1361 = vmatprep.subr.mxu0 0.0
    %1362 = vmatpush1.msra.mxu0 0.0
    %1363 = vmatprep.subr.mxu0 0.0
    %1364 = vmatpush1.msra.mxu0 0.0
    %1365 = vmatprep.subr.mxu0 0.0
    %1366 = vmatpush1.msra.mxu0 0.0
    %1367 = vmatprep.subr.mxu0 0.0
    %1368 = vmatpush1.msra.mxu0 0.0
    %1369 = vmatprep.subr.mxu0 0.0
    %1370 = vmatpush1.msra.mxu0 0.0
    %1371 = vmatprep.subr.mxu0 0.0
    %1372 = vmatpush1.msra.mxu0 0.0
    %1373 = vmatprep.subr.mxu0 0.0
    %1374 = vmatpush1.msra.mxu0 0.0
    %1375 = vmatprep.subr.mxu0 0.0
    %1376 = vmatpush1.msra.mxu0 0.0
    %1377 = vmatprep.mubr.f32.mxu0 0.0
    %1378 = vmatmul.mubr.f32.gmra.mrb[0].mxu0 %v1308
    %v1379 = vpop.f32.mrb[0].mxu0
    %v1380 = vadd.f32 0.0, %v1379
    %v1381 = vpop.f32.mrb[0].mxu0
    %1382 = vmatprep.mubr.f32.mxu0 0.0
    %1383 = vmatmul.mubr.f32.gmra.mrb[0].mxu0 %v1311
    %v1384 = vpop.f32.mrb[0].mxu0
    %v1385 = vadd.f32 0.0, %v1384
    %v1386 = vpop.f32.mrb[0].mxu0
    %1387 = vdwg.mxu0
    %v1388 = vadd.f32 %v969, %v1380
    %v1389 = vadd.f32 %v974, %v1385
    %1390 = vrot.lane.b32.xlu0 %v136, 104
    %v1391 = vpop.permute.xlu0 %1390
    %1392 = vrot.lane.b32.xlu0 %v128, 72
    %v1393 = vpop.permute.xlu0 %1392
    %v1394 = vsel %vm157, %v1391, 0
    %v1396 = vsel %vm157, %v1393, 0
    %1398 = vmatprep.subr.mxu0 0.0
    %1399 = vmatpush1.xpose.msra.mxu0 %v1396
    %1400 = vmatprep.subr.mxu0 0.0
    %1401 = vmatpush1.xpose.msra.mxu0 0.0
    %1402 = vmatprep.subr.mxu0 0.0
    %1403 = vmatpush1.xpose.msra.mxu0 0.0
    %1404 = vmatprep.subr.mxu0 0.0
    %1405 = vmatpush1.xpose.msra.mxu0 0.0
    %1406 = vmatprep.subr.mxu0 0.0
    %1407 = vmatpush1.xpose.msra.mxu0 0.0
    %1408 = vmatprep.subr.mxu0 0.0
    %1409 = vmatpush1.xpose.msra.mxu0 0.0
    %1410 = vmatprep.subr.mxu0 0.0
    %1411 = vmatpush1.xpose.msra.mxu0 0.0
    %1412 = vmatprep.subr.mxu0 0.0
    %1413 = vmatpush1.xpose.msra.mxu0 0.0
    %1414 = vmatprep.subr.mxu0 0.0
    %1415 = vmatpush1.xpose.msra.mxu0 0.0
    %1416 = vmatprep.subr.mxu0 0.0
    %1417 = vmatpush1.xpose.msra.mxu0 0.0
    %1418 = vmatprep.subr.mxu0 0.0
    %1419 = vmatpush1.xpose.msra.mxu0 0.0
    %1420 = vmatprep.subr.mxu0 0.0
    %1421 = vmatpush1.xpose.msra.mxu0 0.0
    %1422 = vmatprep.subr.mxu0 0.0
    %1423 = vmatpush1.xpose.msra.mxu0 0.0
    %1424 = vmatprep.subr.mxu0 0.0
    %1425 = vmatpush1.xpose.msra.mxu0 0.0
    %1426 = vmatprep.subr.mxu0 0.0
    %1427 = vmatpush1.xpose.msra.mxu0 0.0
    %1428 = vmatprep.subr.mxu0 0.0
    %1429 = vmatpush1.xpose.msra.mxu0 0.0
    %1430 = vmatprep.subr.mxu0 0.0
    %1431 = vmatpush1.xpose.msra.mxu0 0.0
    %1432 = vmatprep.subr.mxu0 0.0
    %1433 = vmatpush1.xpose.msra.mxu0 0.0
    %1434 = vmatprep.subr.mxu0 0.0
    %1435 = vmatpush1.xpose.msra.mxu0 0.0
    %1436 = vmatprep.subr.mxu0 0.0
    %1437 = vmatpush1.xpose.msra.mxu0 0.0
    %1438 = vmatprep.subr.mxu0 0.0
    %1439 = vmatpush1.xpose.msra.mxu0 0.0
    %1440 = vmatprep.subr.mxu0 0.0
    %1441 = vmatpush1.xpose.msra.mxu0 0.0
    %1442 = vmatprep.subr.mxu0 0.0
    %1443 = vmatpush1.xpose.msra.mxu0 0.0
    %1444 = vmatprep.subr.mxu0 0.0
    %1445 = vmatpush1.xpose.msra.mxu0 0.0
    %1446 = vmatprep.subr.mxu0 0.0
    %1447 = vmatpush1.xpose.msra.mxu0 0.0
    %1448 = vmatprep.subr.mxu0 0.0
    %1449 = vmatpush1.xpose.msra.mxu0 0.0
    %1450 = vmatprep.subr.mxu0 0.0
    %1451 = vmatpush1.xpose.msra.mxu0 0.0
    %1452 = vmatprep.subr.mxu0 0.0
    %1453 = vmatpush1.xpose.msra.mxu0 0.0
    %1454 = vmatprep.subr.mxu0 0.0
    %1455 = vmatpush1.xpose.msra.mxu0 0.0
    %1456 = vmatprep.subr.mxu0 0.0
    %1457 = vmatpush1.xpose.msra.mxu0 0.0
    %1458 = vmatprep.subr.mxu0 0.0
    %1459 = vmatpush1.xpose.msra.mxu0 0.0
    %1460 = vmatprep.subr.mxu0 0.0
    %1461 = vmatpush1.xpose.msra.mxu0 0.0
    %1462 = vmatprep.mubr.f32.mxu0 0.0
    %1463 = vmatmul.mubr.f32.gmra.mrb[0].mxu0 %v1394
    %v1464 = vpop.f32.mrb[0].mxu0
    %v1465 = vadd.f32 %v147, %v1464
    %v1466 = vpop.f32.mrb[0].mxu0
    %1467 = vdwg.mxu0
    %1468 = vrot.lane.b32.xlu0 %v137, 104
    %v1469 = vpop.permute.xlu0 %1468
    %1470 = vrot.lane.b32.xlu0 %v133, 72
    %v1471 = vpop.permute.xlu0 %1470
    %v1472 = vsel %vm157, %v1469, 0
    %v1474 = vsel %vm157, %v1471, 0
    %1476 = vmatprep.subr.mxu0 0.0
    %1477 = vmatpush1.xpose.msra.mxu0 %v1474
    %1478 = vmatprep.subr.mxu0 0.0
    %1479 = vmatpush1.xpose.msra.mxu0 0.0
    %1480 = vmatprep.subr.mxu0 0.0
    %1481 = vmatpush1.xpose.msra.mxu0 0.0
    %1482 = vmatprep.subr.mxu0 0.0
    %1483 = vmatpush1.xpose.msra.mxu0 0.0
    %1484 = vmatprep.subr.mxu0 0.0
    %1485 = vmatpush1.xpose.msra.mxu0 0.0
    %1486 = vmatprep.subr.mxu0 0.0
    %1487 = vmatpush1.xpose.msra.mxu0 0.0
    %1488 = vmatprep.subr.mxu0 0.0
    %1489 = vmatpush1.xpose.msra.mxu0 0.0
    %1490 = vmatprep.subr.mxu0 0.0
    %1491 = vmatpush1.xpose.msra.mxu0 0.0
    %1492 = vmatprep.subr.mxu0 0.0
    %1493 = vmatpush1.xpose.msra.mxu0 0.0
    %1494 = vmatprep.subr.mxu0 0.0
    %1495 = vmatpush1.xpose.msra.mxu0 0.0
    %1496 = vmatprep.subr.mxu0 0.0
    %1497 = vmatpush1.xpose.msra.mxu0 0.0
    %1498 = vmatprep.subr.mxu0 0.0
    %1499 = vmatpush1.xpose.msra.mxu0 0.0
    %1500 = vmatprep.subr.mxu0 0.0
    %1501 = vmatpush1.xpose.msra.mxu0 0.0
    %1502 = vmatprep.subr.mxu0 0.0
    %1503 = vmatpush1.xpose.msra.mxu0 0.0
    %1504 = vmatprep.subr.mxu0 0.0
    %1505 = vmatpush1.xpose.msra.mxu0 0.0
    %1506 = vmatprep.subr.mxu0 0.0
    %1507 = vmatpush1.xpose.msra.mxu0 0.0
    %1508 = vmatprep.subr.mxu0 0.0
    %1509 = vmatpush1.xpose.msra.mxu0 0.0
    %1510 = vmatprep.subr.mxu0 0.0
    %1511 = vmatpush1.xpose.msra.mxu0 0.0
    %1512 = vmatprep.subr.mxu0 0.0
    %1513 = vmatpush1.xpose.msra.mxu0 0.0
    %1514 = vmatprep.subr.mxu0 0.0
    %1515 = vmatpush1.xpose.msra.mxu0 0.0
    %1516 = vmatprep.subr.mxu0 0.0
    %1517 = vmatpush1.xpose.msra.mxu0 0.0
    %1518 = vmatprep.subr.mxu0 0.0
    %1519 = vmatpush1.xpose.msra.mxu0 0.0
    %1520 = vmatprep.subr.mxu0 0.0
    %1521 = vmatpush1.xpose.msra.mxu0 0.0
    %1522 = vmatprep.subr.mxu0 0.0
    %1523 = vmatpush1.xpose.msra.mxu0 0.0
    %1524 = vmatprep.subr.mxu0 0.0
    %1525 = vmatpush1.xpose.msra.mxu0 0.0
    %1526 = vmatprep.subr.mxu0 0.0
    %1527 = vmatpush1.xpose.msra.mxu0 0.0
    %1528 = vmatprep.subr.mxu0 0.0
    %1529 = vmatpush1.xpose.msra.mxu0 0.0
    %1530 = vmatprep.subr.mxu0 0.0
    %1531 = vmatpush1.xpose.msra.mxu0 0.0
    %1532 = vmatprep.subr.mxu0 0.0
    %1533 = vmatpush1.xpose.msra.mxu0 0.0
    %1534 = vmatprep.subr.mxu0 0.0
    %1535 = vmatpush1.xpose.msra.mxu0 0.0
    %1536 = vmatprep.subr.mxu0 0.0
    %1537 = vmatpush1.xpose.msra.mxu0 0.0
    %1538 = vmatprep.subr.mxu0 0.0
    %1539 = vmatpush1.xpose.msra.mxu0 0.0
    %1540 = vmatprep.mubr.f32.mxu0 0.0
    %1541 = vmatmul.mubr.f32.gmra.mrb[0].mxu0 %v1472
    %v1542 = vpop.f32.mrb[0].mxu0
    %v1543 = vadd.f32 %v151, %v1542
    %v1544 = vpop.f32.mrb[0].mxu0
    %1545 = vdwg.mxu0
    %v1546 = vsel %vm157, %v1465, -inf
    %1547 = vmax.xlane.f32.xlu0 %v1546
    %v1548 = vpop.xlane.xlu0 %1547
    %v1549 = vsel %vm157, %v1543, -inf
    %1550 = vmax.xlane.f32.xlu0 %v1549
    %v1551 = vpop.xlane.xlu0 %1550
    %v1552 = vsub.f32 %v1465, %v1548
    %v1553 = vsub.f32 %v1543, %v1551
    %v1554 = vmul.f32 %v1552, 1.442695
    %v1555 = vpow.pop %v1554
    %v1556 = vmul.f32 %v1553, 1.442695
    %v1557 = vpow.pop %v1556
    %v1558 = vsel %vm157, %v1555, 0.0
    %1559 = vadd.xlane.f32.xlu0 %v1558
    %v1560 = vpop.xlane.xlu0 %1559
    %v1561 = vsel %vm157, %v1557, 0.0
    %1562 = vadd.xlane.f32.xlu0 %v1561
    %v1563 = vpop.xlane.xlu0 %1562
    %v1564 = vrcp.pop %v1560
    %v1565 = vrcp.pop %v1563
    %v1566 = vmul.f32 %v1555, %v1564
    %v1567 = vmul.f32 %v1557, %v1565
    %1568 = vrot.lane.b32.xlu0 %v128, 40
    %v1569 = vpop.permute.xlu0 %1568
    %v1572 = vsel %vm157, %v1566, 0
    %1574 = vmatprep.subr.mxu0 0.0
    %1575 = vmatpush1.msra.mxu0 %v1569
    %1576 = vmatprep.subr.mxu0 0.0
    %1577 = vmatpush1.msra.mxu0 0.0
    %1578 = vmatprep.subr.mxu0 0.0
    %1579 = vmatpush1.msra.mxu0 0.0
    %1580 = vmatprep.subr.mxu0 0.0
    %1581 = vmatpush1.msra.mxu0 0.0
    %1582 = vmatprep.subr.mxu0 0.0
    %1583 = vmatpush1.msra.mxu0 0.0
    %1584 = vmatprep.subr.mxu0 0.0
    %1585 = vmatpush1.msra.mxu0 0.0
    %1586 = vmatprep.subr.mxu0 0.0
    %1587 = vmatpush1.msra.mxu0 0.0
    %1588 = vmatprep.subr.mxu0 0.0
    %1589 = vmatpush1.msra.mxu0 0.0
    %1590 = vmatprep.subr.mxu0 0.0
    %1591 = vmatpush1.msra.mxu0 0.0
    %1592 = vmatprep.subr.mxu0 0.0
    %1593 = vmatpush1.msra.mxu0 0.0
    %1594 = vmatprep.subr.mxu0 0.0
    %1595 = vmatpush1.msra.mxu0 0.0
    %1596 = vmatprep.subr.mxu0 0.0
    %1597 = vmatpush1.msra.mxu0 0.0
    %1598 = vmatprep.subr.mxu0 0.0
    %1599 = vmatpush1.msra.mxu0 0.0
    %1600 = vmatprep.subr.mxu0 0.0
    %1601 = vmatpush1.msra.mxu0 0.0
    %1602 = vmatprep.subr.mxu0 0.0
    %1603 = vmatpush1.msra.mxu0 0.0
    %1604 = vmatprep.subr.mxu0 0.0
    %1605 = vmatpush1.msra.mxu0 0.0
    %1606 = vmatprep.subr.mxu0 0.0
    %1607 = vmatpush1.msra.mxu0 0.0
    %1608 = vmatprep.subr.mxu0 0.0
    %1609 = vmatpush1.msra.mxu0 0.0
    %1610 = vmatprep.subr.mxu0 0.0
    %1611 = vmatpush1.msra.mxu0 0.0
    %1612 = vmatprep.subr.mxu0 0.0
    %1613 = vmatpush1.msra.mxu0 0.0
    %1614 = vmatprep.subr.mxu0 0.0
    %1615 = vmatpush1.msra.mxu0 0.0
    %1616 = vmatprep.subr.mxu0 0.0
    %1617 = vmatpush1.msra.mxu0 0.0
    %1618 = vmatprep.subr.mxu0 0.0
    %1619 = vmatpush1.msra.mxu0 0.0
    %1620 = vmatprep.subr.mxu0 0.0
    %1621 = vmatpush1.msra.mxu0 0.0
    %1622 = vmatprep.subr.mxu0 0.0
    %1623 = vmatpush1.msra.mxu0 0.0
    %1624 = vmatprep.subr.mxu0 0.0
    %1625 = vmatpush1.msra.mxu0 0.0
    %1626 = vmatprep.subr.mxu0 0.0
    %1627 = vmatpush1.msra.mxu0 0.0
    %1628 = vmatprep.subr.mxu0 0.0
    %1629 = vmatpush1.msra.mxu0 0.0
    %1630 = vmatprep.subr.mxu0 0.0
    %1631 = vmatpush1.msra.mxu0 0.0
    %1632 = vmatprep.subr.mxu0 0.0
    %1633 = vmatpush1.msra.mxu0 0.0
    %1634 = vmatprep.subr.mxu0 0.0
    %1635 = vmatpush1.msra.mxu0 0.0
    %1636 = vmatprep.subr.mxu0 0.0
    %1637 = vmatpush1.msra.mxu0 0.0
    %1638 = vmatprep.mubr.f32.mxu0 0.0
    %1639 = vmatmul.mubr.f32.gmra.mrb[0].mxu0 %v1572
    %v1640 = vpop.f32.mrb[0].mxu0
    %v1641 = vadd.f32 0.0, %v1640
    %v1642 = vpop.f32.mrb[0].mxu0
    %1643 = vdwg.mxu0
    %1644 = vrot.lane.b32.xlu0 %v133, 40
    %v1645 = vpop.permute.xlu0 %1644
    %v1648 = vsel %vm157, %v1567, 0
    %1650 = vmatprep.subr.mxu0 0.0
    %1651 = vmatpush1.msra.mxu0 %v1645
    %1652 = vmatprep.subr.mxu0 0.0
    %1653 = vmatpush1.msra.mxu0 0.0
    %1654 = vmatprep.subr.mxu0 0.0
    %1655 = vmatpush1.msra.mxu0 0.0
    %1656 = vmatprep.subr.mxu0 0.0
    %1657 = vmatpush1.msra.mxu0 0.0
    %1658 = vmatprep.subr.mxu0 0.0
    %1659 = vmatpush1.msra.mxu0 0.0
    %1660 = vmatprep.subr.mxu0 0.0
    %1661 = vmatpush1.msra.mxu0 0.0
    %1662 = vmatprep.subr.mxu0 0.0
    %1663 = vmatpush1.msra.mxu0 0.0
    %1664 = vmatprep.subr.mxu0 0.0
    %1665 = vmatpush1.msra.mxu0 0.0
    %1666 = vmatprep.subr.mxu0 0.0
    %1667 = vmatpush1.msra.mxu0 0.0
    %1668 = vmatprep.subr.mxu0 0.0
    %1669 = vmatpush1.msra.mxu0 0.0
    %1670 = vmatprep.subr.mxu0 0.0
    %1671 = vmatpush1.msra.mxu0 0.0
    %1672 = vmatprep.subr.mxu0 0.0
    %1673 = vmatpush1.msra.mxu0 0.0
    %1674 = vmatprep.subr.mxu0 0.0
    %1675 = vmatpush1.msra.mxu0 0.0
    %1676 = vmatprep.subr.mxu0 0.0
    %1677 = vmatpush1.msra.mxu0 0.0
    %1678 = vmatprep.subr.mxu0 0.0
    %1679 = vmatpush1.msra.mxu0 0.0
    %1680 = vmatprep.subr.mxu0 0.0
    %1681 = vmatpush1.msra.mxu0 0.0
    %1682 = vmatprep.subr.mxu0 0.0
    %1683 = vmatpush1.msra.mxu0 0.0
    %1684 = vmatprep.subr.mxu0 0.0
    %1685 = vmatpush1.msra.mxu0 0.0
    %1686 = vmatprep.subr.mxu0 0.0
    %1687 = vmatpush1.msra.mxu0 0.0
    %1688 = vmatprep.subr.mxu0 0.0
    %1689 = vmatpush1.msra.mxu0 0.0
    %1690 = vmatprep.subr.mxu0 0.0
    %1691 = vmatpush1.msra.mxu0 0.0
    %1692 = vmatprep.subr.mxu0 0.0
    %1693 = vmatpush1.msra.mxu0 0.0
    %1694 = vmatprep.subr.mxu0 0.0
    %1695 = vmatpush1.msra.mxu0 0.0
    %1696 = vmatprep.subr.mxu0 0.0
    %1697 = vmatpush1.msra.mxu0 0.0
    %1698 = vmatprep.subr.mxu0 0.0
    %1699 = vmatpush1.msra.mxu0 0.0
    %1700 = vmatprep.subr.mxu0 0.0
    %1701 = vmatpush1.msra.mxu0 0.0
    %1702 = vmatprep.subr.mxu0 0.0
    %1703 = vmatpush1.msra.mxu0 0.0
    %1704 = vmatprep.subr.mxu0 0.0
    %1705 = vmatpush1.msra.mxu0 0.0
    %1706 = vmatprep.subr.mxu0 0.0
    %1707 = vmatpush1.msra.mxu0 0.0
    %1708 = vmatprep.subr.mxu0 0.0
    %1709 = vmatpush1.msra.mxu0 0.0
    %1710 = vmatprep.subr.mxu0 0.0
    %1711 = vmatpush1.msra.mxu0 0.0
    %1712 = vmatprep.subr.mxu0 0.0
    %1713 = vmatpush1.msra.mxu0 0.0
    %1714 = vmatprep.mubr.f32.mxu0 0.0
    %1715 = vmatmul.mubr.f32.gmra.mrb[0].mxu0 %v1648
    %v1716 = vpop.f32.mrb[0].mxu0
    %v1717 = vadd.f32 0.0, %v1716
    %v1718 = vpop.f32.mrb[0].mxu0
    %1719 = vdwg.mxu0
    %v1721 = vsel %vm157, %v1641, 0
    %v1724 = vsel %vm157, %v1717, 0
    %1726 = vmatprep.subr.mxu0 0.0
    %1727 = vmatpush1.msra.mxu0 %v141
    %1728 = vmatprep.subr.mxu0 0.0
    %1729 = vmatpush1.msra.mxu0 0.0
    %1730 = vmatprep.subr.mxu0 0.0
    %1731 = vmatpush1.msra.mxu0 0.0
    %1732 = vmatprep.subr.mxu0 0.0
    %1733 = vmatpush1.msra.mxu0 0.0
    %1734 = vmatprep.subr.mxu0 0.0
    %1735 = vmatpush1.msra.mxu0 0.0
    %1736 = vmatprep.subr.mxu0 0.0
    %1737 = vmatpush1.msra.mxu0 0.0
    %1738 = vmatprep.subr.mxu0 0.0
    %1739 = vmatpush1.msra.mxu0 0.0
    %1740 = vmatprep.subr.mxu0 0.0
    %1741 = vmatpush1.msra.mxu0 0.0
    %1742 = vmatprep.subr.mxu0 0.0
    %1743 = vmatpush1.msra.mxu0 0.0
    %1744 = vmatprep.subr.mxu0 0.0
    %1745 = vmatpush1.msra.mxu0 0.0
    %1746 = vmatprep.subr.mxu0 0.0
    %1747 = vmatpush1.msra.mxu0 0.0
    %1748 = vmatprep.subr.mxu0 0.0
    %1749 = vmatpush1.msra.mxu0 0.0
    %1750 = vmatprep.subr.mxu0 0.0
    %1751 = vmatpush1.msra.mxu0 0.0
    %1752 = vmatprep.subr.mxu0 0.0
    %1753 = vmatpush1.msra.mxu0 0.0
    %1754 = vmatprep.subr.mxu0 0.0
    %1755 = vmatpush1.msra.mxu0 0.0
    %1756 = vmatprep.subr.mxu0 0.0
    %1757 = vmatpush1.msra.mxu0 0.0
    %1758 = vmatprep.subr.mxu0 0.0
    %1759 = vmatpush1.msra.mxu0 0.0
    %1760 = vmatprep.subr.mxu0 0.0
    %1761 = vmatpush1.msra.mxu0 0.0
    %1762 = vmatprep.subr.mxu0 0.0
    %1763 = vmatpush1.msra.mxu0 0.0
    %1764 = vmatprep.subr.mxu0 0.0
    %1765 = vmatpush1.msra.mxu0 0.0
    %1766 = vmatprep.subr.mxu0 0.0
    %1767 = vmatpush1.msra.mxu0 0.0
    %1768 = vmatprep.subr.mxu0 0.0
    %1769 = vmatpush1.msra.mxu0 0.0
    %1770 = vmatprep.subr.mxu0 0.0
    %1771 = vmatpush1.msra.mxu0 0.0
    %1772 = vmatprep.subr.mxu0 0.0
    %1773 = vmatpush1.msra.mxu0 0.0
    %1774 = vmatprep.subr.mxu0 0.0
    %1775 = vmatpush1.msra.mxu0 0.0
    %1776 = vmatprep.subr.mxu0 0.0
    %1777 = vmatpush1.msra.mxu0 0.0
    %1778 = vmatprep.subr.mxu0 0.0
    %1779 = vmatpush1.msra.mxu0 0.0
    %1780 = vmatprep.subr.mxu0 0.0
    %1781 = vmatpush1.msra.mxu0 0.0
    %1782 = vmatprep.subr.mxu0 0.0
    %1783 = vmatpush1.msra.mxu0 0.0
    %1784 = vmatprep.subr.mxu0 0.0
    %1785 = vmatpush1.msra.mxu0 0.0
    %1786 = vmatprep.subr.mxu0 0.0
    %1787 = vmatpush1.msra.mxu0 0.0
    %1788 = vmatprep.subr.mxu0 0.0
    %1789 = vmatpush1.msra.mxu0 0.0
    %1790 = vmatprep.mubr.f32.mxu0 0.0
    %1791 = vmatmul.mubr.f32.gmra.mrb[0].mxu0 %v1721
    %v1792 = vpop.f32.mrb[0].mxu0
    %v1793 = vadd.f32 0.0, %v1792
    %v1794 = vpop.f32.mrb[0].mxu0
    %1795 = vmatprep.mubr.f32.mxu0 0.0
    %1796 = vmatmul.mubr.f32.gmra.mrb[0].mxu0 %v1724
    %v1797 = vpop.f32.mrb[0].mxu0
    %v1798 = vadd.f32 0.0, %v1797
    %v1799 = vpop.f32.mrb[0].mxu0
    %1800 = vdwg.mxu0
    %v1801 = vadd.f32 %v1388, %v1793
    %v1802 = vadd.f32 %v1389, %v1798
    %v1803 = vlaneseq
    %v1804 = vshrl.u32 %v1803, 7
    %v1805 = vsub.s32 2, %v1804
    %v1806 = vrot.slane %v45, %v1805
    %v1807 = vadd.f32 %v1801, %v1806
    %v1808 = vadd.f32 %v1802, %v1806
    %v1809 = vadd.f32 %v41, %v1807
    %v1810 = vadd.f32 %v42, %v1808
    %v1811 = vsel %vm54, %v1809, 0.0
    %1812 = vadd.xlane.f32.xlu0 %v1811
    %v1813 = vpop.xlane.xlu0 %1812
    %v1814 = vsel %vm54, %v1810, 0.0
    %1815 = vadd.xlane.f32.xlu0 %v1814
    %v1816 = vpop.xlane.xlu0 %1815
    %v1817 = vrcp.pop 32.0
    %v1818 = vmul.f32 %v1813, %v1817
    %v1819 = vmul.f32 %v1816, %v1817
    %v1820 = vsub.f32 %v1809, %v1818
    %v1821 = vsub.f32 %v1810, %v1819
    %v1822 = vmul.f32 %v1820, %v1820
    %v1823 = vmul.f32 %v1821, %v1821
    %v1824 = vsel %vm54, %v1822, 0.0
    %1825 = vadd.xlane.f32.xlu0 %v1824
    %v1826 = vpop.xlane.xlu0 %1825
    %v1827 = vsel %vm54, %v1823, 0.0
    %1828 = vadd.xlane.f32.xlu0 %v1827
    %v1829 = vpop.xlane.xlu0 %1828
    %v1830 = vmul.f32 %v1826, %v1817
    %v1831 = vmul.f32 %v1829, %v1817
    %v1832 = vadd.f32 %v1830, 1e-05
    %v1833 = vadd.f32 %v1831, 1e-05
    %v1834 = vrsqrt.pop %v1832
    %v1835 = vrsqrt.pop %v1833
    %v1836 = vmul.f32 %v1820, %v1834
    %v1837 = vmul.f32 %v1821, %v1835
    %v1838 = vlaneseq
    %v1839 = vshrl.u32 %v1838, 7
    %v1840 = vsub.s32 4, %v1839
    %v1841 = vrot.slane %v45, %v1840
    %v1842 = vmul.f32 %v1836, %v1841
    %v1843 = vmul.f32 %v1837, %v1841
    %v1844 = vlaneseq
    %v1845 = vshrl.u32 %v1844, 7
    %v1846 = vsub.s32 5, %v1845
    %v1847 = vrot.slane %v45, %v1846
    %v1848 = vadd.f32 %v1842, %v1847
    %v1849 = vadd.f32 %v1843, %v1847
    %v1850 = vld [vmem:[%s4] sm:$0xff]
    %v1851 = vld [vmem:[%s4 + $0x8] sm:$0xff]
    %v1852 = vld [vmem:[%s4 + $0x10] sm:$0xff]
    %v1853 = vld [vmem:[%s4 + $0x18] sm:$0xff]
    %v1854 = vlaneseq
    %v1855 = vshrl.u32 %v1854, 7
    %v1856 = vsub.s32 1, %v1855
    %v1857 = vrot.slane %v45, %v1856
    %v1859 = vsel %vm54, %v1848, 0
    %v1862 = vsel %vm54, %v1849, 0
    %1864 = vmatprep.subr.mxu0 0.0
    %1865 = vmatpush1.msra.mxu0 %v1850
    %1866 = vmatprep.subr.mxu0 0.0
    %1867 = vmatpush1.msra.mxu0 %v1851
    %1868 = vmatprep.subr.mxu0 0.0
    %1869 = vmatpush1.msra.mxu0 %v1852
    %1870 = vmatprep.subr.mxu0 0.0
    %1871 = vmatpush1.msra.mxu0 %v1853
    %1872 = vmatprep.subr.mxu0 0.0
    %1873 = vmatpush1.msra.mxu0 0.0
    %1874 = vmatprep.subr.mxu0 0.0
    %1875 = vmatpush1.msra.mxu0 0.0
    %1876 = vmatprep.subr.mxu0 0.0
    %1877 = vmatpush1.msra.mxu0 0.0
    %1878 = vmatprep.subr.mxu0 0.0
    %1879 = vmatpush1.msra.mxu0 0.0
    %1880 = vmatprep.subr.mxu0 0.0
    %1881 = vmatpush1.msra.mxu0 0.0
    %1882 = vmatprep.subr.mxu0 0.0
    %1883 = vmatpush1.msra.mxu0 0.0
    %1884 = vmatprep.subr.mxu0 0.0
    %1885 = vmatpush1.msra.mxu0 0.0
    %1886 = vmatprep.subr.mxu0 0.0
    %1887 = vmatpush1.msra.mxu0 0.0
    %1888 = vmatprep.subr.mxu0 0.0
    %1889 = vmatpush1.msra.mxu0 0.0
    %1890 = vmatprep.subr.mxu0 0.0
    %1891 = vmatpush1.msra.mxu0 0.0
    %1892 = vmatprep.subr.mxu0 0.0
    %1893 = vmatpush1.msra.mxu0 0.0
    %1894 = vmatprep.subr.mxu0 0.0
    %1895 = vmatpush1.msra.mxu0 0.0
    %1896 = vmatprep.subr.mxu0 0.0
    %1897 = vmatpush1.msra.mxu0 0.0
    %1898 = vmatprep.subr.mxu0 0.0
    %1899 = vmatpush1.msra.mxu0 0.0
    %1900 = vmatprep.subr.mxu0 0.0
    %1901 = vmatpush1.msra.mxu0 0.0
    %1902 = vmatprep.subr.mxu0 0.0
    %1903 = vmatpush1.msra.mxu0 0.0
    %1904 = vmatprep.subr.mxu0 0.0
    %1905 = vmatpush1.msra.mxu0 0.0
    %1906 = vmatprep.subr.mxu0 0.0
    %1907 = vmatpush1.msra.mxu0 0.0
    %1908 = vmatprep.subr.mxu0 0.0
    %1909 = vmatpush1.msra.mxu0 0.0
    %1910 = vmatprep.subr.mxu0 0.0
    %1911 = vmatpush1.msra.mxu0 0.0
    %1912 = vmatprep.subr.mxu0 0.0
    %1913 = vmatpush1.msra.mxu0 0.0
    %1914 = vmatprep.subr.mxu0 0.0
    %1915 = vmatpush1.msra.mxu0 0.0
    %1916 = vmatprep.subr.mxu0 0.0
    %1917 = vmatpush1.msra.mxu0 0.0
    %1918 = vmatprep.subr.mxu0 0.0
    %1919 = vmatpush1.msra.mxu0 0.0
    %1920 = vmatprep.subr.mxu0 0.0
    %1921 = vmatpush1.msra.mxu0 0.0
    %1922 = vmatprep.subr.mxu0 0.0
    %1923 = vmatpush1.msra.mxu0 0.0
    %1924 = vmatprep.subr.mxu0 0.0
    %1925 = vmatpush1.msra.mxu0 0.0
    %1926 = vmatprep.subr.mxu0 0.0
    %1927 = vmatpush1.msra.mxu0 0.0
    %1928 = vmatprep.mubr.f32.mxu0 0.0
    %1929 = vmatmul.mubr.f32.gmra.mrb[0].mxu0 %v1859
    %v1930 = vpop.f32.mrb[0].mxu0
    %v1931 = vadd.f32 %v1857, %v1930
    %v1932 = vpop.f32.mrb[0].mxu0
    %1933 = vmatprep.mubr.f32.mxu0 0.0
    %1934 = vmatmul.mubr.f32.gmra.mrb[0].mxu0 %v1862
    %v1935 = vpop.f32.mrb[0].mxu0
    %v1936 = vadd.f32 %v1857, %v1935
    %v1937 = vpop.f32.mrb[0].mxu0
    %1938 = vdwg.mxu0
    %v1939 = vmax.f32 %v1931, 0.0
    %v1940 = vmax.f32 %v1936, 0.0
    %v1941 = vld [vmem:[%s5] sm:$0xff]
    %v1942 = vld [vmem:[%s5 + $0x8] sm:$0xff]
    %v1943 = vld [vmem:[%s5 + $0x10] sm:$0xff]
    %v1944 = vld [vmem:[%s5 + $0x18] sm:$0xff]
    %v1945 = vld [vmem:[%s5 + $0x20] sm:$0xff]
    %v1946 = vld [vmem:[%s5 + $0x28] sm:$0xff]
    %v1947 = vld [vmem:[%s5 + $0x30] sm:$0xff]
    %v1948 = vld [vmem:[%s5 + $0x38] sm:$0xff]
    %v1949 = vlaneseq
    %v1950 = vshrl.u32 %v1949, 7
    %v1951 = vsub.s32 3, %v1950
    %v1952 = vrot.slane %v45, %v1951
    %vm1953 = vcmask 523264
    %v1955 = vsel %vm1953, %v1939, 0
    %v1958 = vsel %vm1953, %v1940, 0
    %1960 = vmatprep.subr.mxu0 0.0
    %1961 = vmatpush1.msra.mxu0 %v1941
    %1962 = vmatprep.subr.mxu0 0.0
    %1963 = vmatpush1.msra.mxu0 %v1942
    %1964 = vmatprep.subr.mxu0 0.0
    %1965 = vmatpush1.msra.mxu0 %v1943
    %1966 = vmatprep.subr.mxu0 0.0
    %1967 = vmatpush1.msra.mxu0 %v1944
    %1968 = vmatprep.subr.mxu0 0.0
    %1969 = vmatpush1.msra.mxu0 %v1945
    %1970 = vmatprep.subr.mxu0 0.0
    %1971 = vmatpush1.msra.mxu0 %v1946
    %1972 = vmatprep.subr.mxu0 0.0
    %1973 = vmatpush1.msra.mxu0 %v1947
    %1974 = vmatprep.subr.mxu0 0.0
    %1975 = vmatpush1.msra.mxu0 %v1948
    %1976 = vmatprep.subr.mxu0 0.0
    %1977 = vmatpush1.msra.mxu0 0.0
    %1978 = vmatprep.subr.mxu0 0.0
    %1979 = vmatpush1.msra.mxu0 0.0
    %1980 = vmatprep.subr.mxu0 0.0
    %1981 = vmatpush1.msra.mxu0 0.0
    %1982 = vmatprep.subr.mxu0 0.0
    %1983 = vmatpush1.msra.mxu0 0.0
    %1984 = vmatprep.subr.mxu0 0.0
    %1985 = vmatpush1.msra.mxu0 0.0
    %1986 = vmatprep.subr.mxu0 0.0
    %1987 = vmatpush1.msra.mxu0 0.0
    %1988 = vmatprep.subr.mxu0 0.0
    %1989 = vmatpush1.msra.mxu0 0.0
    %1990 = vmatprep.subr.mxu0 0.0
    %1991 = vmatpush1.msra.mxu0 0.0
    %1992 = vmatprep.subr.mxu0 0.0
    %1993 = vmatpush1.msra.mxu0 0.0
    %1994 = vmatprep.subr.mxu0 0.0
    %1995 = vmatpush1.msra.mxu0 0.0
    %1996 = vmatprep.subr.mxu0 0.0
    %1997 = vmatpush1.msra.mxu0 0.0
    %1998 = vmatprep.subr.mxu0 0.0
    %1999 = vmatpush1.msra.mxu0 0.0
    %2000 = vmatprep.subr.mxu0 0.0
    %2001 = vmatpush1.msra.mxu0 0.0
    %2002 = vmatprep.subr.mxu0 0.0
    %2003 = vmatpush1.msra.mxu0 0.0
    %2004 = vmatprep.subr.mxu0 0.0
    %2005 = vmatpush1.msra.mxu0 0.0
    %2006 = vmatprep.subr.mxu0 0.0
    %2007 = vmatpush1.msra.mxu0 0.0
    %2008 = vmatprep.subr.mxu0 0.0
    %2009 = vmatpush1.msra.mxu0 0.0
    %2010 = vmatprep.subr.mxu0 0.0
    %2011 = vmatpush1.msra.mxu0 0.0
    %2012 = vmatprep.subr.mxu0 0.0
    %2013 = vmatpush1.msra.mxu0 0.0
    %2014 = vmatprep.subr.mxu0 0.0
    %2015 = vmatpush1.msra.mxu0 0.0
    %2016 = vmatprep.subr.mxu0 0.0
    %2017 = vmatpush1.msra.mxu0 0.0
    %2018 = vmatprep.subr.mxu0 0.0
    %2019 = vmatpush1.msra.mxu0 0.0
    %2020 = vmatprep.subr.mxu0 0.0
    %2021 = vmatpush1.msra.mxu0 0.0
    %2022 = vmatprep.subr.mxu0 0.0
    %2023 = vmatpush1.msra.mxu0 0.0
    %2024 = vmatprep.mubr.f32.mxu0 0.0
    %2025 = vmatmul.mubr.f32.gmra.mrb[0].mxu0 %v1955
    %v2026 = vpop.f32.mrb[0].mxu0
    %v2027 = vadd.f32 %v1952, %v2026
    %v2028 = vpop.f32.mrb[0].mxu0
    %2029 = vmatprep.mubr.f32.mxu0 0.0
    %2030 = vmatmul.mubr.f32.gmra.mrb[0].mxu0 %v1958
    %v2031 = vpop.f32.mrb[0].mxu0
    %v2032 = vadd.f32 %v1952, %v2031
    %v2033 = vpop.f32.mrb[0].mxu0
    %2034 = vdwg.mxu0
    %v2035 = vadd.f32 %v1848, %v2027
    %v2036 = vadd.f32 %v1849, %v2032
    %v2037 = vsel %vm54, %v2035, 0.0
    %2038 = vadd.xlane.f32.xlu0 %v2037
    %v2039 = vpop.xlane.xlu0 %2038
    %v2040 = vsel %vm54, %v2036, 0.0
    %2041 = vadd.xlane.f32.xlu0 %v2040
    %v2042 = vpop.xlane.xlu0 %2041
    %v2043 = vmul.f32 %v2039, %v1817
    %v2044 = vmul.f32 %v2042, %v1817
    %v2045 = vsub.f32 %v2035, %v2043
    %v2046 = vsub.f32 %v2036, %v2044
    %v2047 = vmul.f32 %v2045, %v2045
    %v2048 = vmul.f32 %v2046, %v2046
    %v2049 = vsel %vm54, %v2047, 0.0
    %2050 = vadd.xlane.f32.xlu0 %v2049
    %v2051 = vpop.xlane.xlu0 %2050
    %v2052 = vsel %vm54, %v2048, 0.0
    %2053 = vadd.xlane.f32.xlu0 %v2052
    %v2054 = vpop.xlane.xlu0 %2053
    %v2055 = vmul.f32 %v2051, %v1817
    %v2056 = vmul.f32 %v2054, %v1817
    %v2057 = vadd.f32 %v2055, 1e-05
    %v2058 = vadd.f32 %v2056, 1e-05
    %v2059 = vrsqrt.pop %v2057
    %v2060 = vrsqrt.pop %v2058
    %v2061 = vmul.f32 %v2045, %v2059
    %v2062 = vmul.f32 %v2046, %v2060
    %v2063 = vlaneseq
    %v2064 = vshrl.u32 %v2063, 7
    %v2065 = vsub.s32 6, %v2064
    %v2066 = vrot.slane %v45, %v2065
    %v2067 = vmul.f32 %v2061, %v2066
    %v2068 = vmul.f32 %v2062, %v2066
    %v2069 = vlaneseq
    %v2070 = vshrl.u32 %v2069, 7
    %v2071 = vsub.s32 7, %v2070
    %v2072 = vrot.slane %v45, %v2071
    %v2073 = vadd.f32 %v2067, %v2072
    %v2074 = vadd.f32 %v2068, %v2072
    %2075 = vst.msk [vmem:[#allocation5] sm:$0xff] %vm54, %v2073
    %2076 = vst.msk [vmem:[#allocation5 + $0x8] sm:$0xff] %vm54, %v2074
    // Predicated region
    $region34: #{tpu_custom_call.1} parent=1 // pred_check
      _
    $region35: #{tpu_custom_call.1} parent=1 // pred_check_branch
      %2078 = sbr.rel (0) target = $region37
    $region36: #{tpu_custom_call.1} parent=1 // pred_region
      %s2080 = ssub.s32 256, 256
      %2081 = vsyncadd [#allocation4], %s2080
      %s2082 = sshll.u32 [#allocation5], 4
      %s2083 = int_to_ptr.vmem [resolvable:$true] %s2082
      %2088 = dma.vmem_to_hbm [thread:$0]  %s2083, 256, %s7, [#allocation4], 128, 128, 8
    $region37: #{tpu_custom_call.1} parent=1 // pred_fallthru
      _
    // Predicated region
    $region38: #{tpu_custom_call.1} parent=1 // pred_check
      _
    $region39: #{tpu_custom_call.1} parent=1 // pred_check_branch
      %2090 = sbr.rel (0) target = $region41
    $region40: #{tpu_custom_call.1} parent=1 // pred_region
      %2091 = dma.done [#allocation4], 256
    $region41: #{tpu_custom_call.1} parent=1 // pred_fallthru
      _
    %2092 = vsyncpa [#allocation3], 1
    %2093 = vsyncpa [#allocation4], 1

</llo_original>
